<compile_context>
chip_gen: v5e
topology: v5e:2x2
jax: 0.10.0
libtpu: 0.0.40
codegen_flags: <defaults>
</compile_context>

<pallas_src>
import functools
import math

import jax
import jax.numpy as jnp
from jax.experimental import pallas as pl
from jax.experimental.pallas import tpu as pltpu


def _bmm_nn(a, b):
    """(H, M, K) x (H, K, N) -> (H, M, N), f32 accumulation on the MXU."""
    return jax.lax.dot_general(
        a, b, (((2,), (1,)), ((0,), (0,))), preferred_element_type=jnp.float32)


def _bmm_nt(a, b):
    """(H, M, K) x (H, N, K) -> (H, M, N), f32 accumulation, no transpose op."""
    return jax.lax.dot_general(
        a, b, (((2,), (2,)), ((0,), (0,))), preferred_element_type=jnp.float32)


def _mha_kernel(q_ref, k_ref, v_ref, wq_ref, wk_ref, wv_ref, wfc_ref,
                gamma_ref, beta_ref, out_ref, attn_ref, *, n_head):
    bb = q_ref.shape[0]                       # batch elements per grid step
    len_k = k_ref.shape[1]
    len_v = v_ref.shape[1]
    d_model = q_ref.shape[2]

    # ---- LayerNorm(q) over last dim, f32 stats; residual is pre-LN q. ----
    q = q_ref[...].astype(jnp.float32)                         # (bb, Lq, D)
    mean = jnp.mean(q, axis=-1, keepdims=True)
    var = jnp.mean(jnp.square(q - mean), axis=-1, keepdims=True)
    qn = (q - mean) * jax.lax.rsqrt(var + 1e-6)
    qn = qn * gamma_ref[...] + beta_ref[...]                   # (1, D) bcast
    qn_b = qn.astype(jnp.bfloat16)

    # Head-major bf16 weights (scale for Q already folded in by the wrapper).
    wq = wq_ref[...]           # (H, D, d_k)
    wk = wk_ref[...]           # (H, D, d_k)
    wv = wv_ref[...]           # (H, D, d_v)
    wfc = wfc_ref[...]         # (H, d_v, D)

    for b in range(bb):                                        # static unroll
        # Broadcast activations over the head axis (leading/major dim only).
        qh = jnp.broadcast_to(qn_b[b][None], (n_head, qn_b.shape[1], d_model))
        kh = jnp.broadcast_to(k_ref[b][None], (n_head, len_k, d_model))
        vh = jnp.broadcast_to(v_ref[b][None], (n_head, len_v, d_model))

        # Head-batched projections: one dot_general each, head-major output.
        Q = _bmm_nn(qh, wq)                                    # (H, Lq, d_k) f32
        K = _bmm_nn(kh, wk)                                    # (H, Lk, d_k) f32
        V = _bmm_nn(vh, wv)                                    # (H, Lk, d_v) f32

        # Logits: contraction over d_k, NT form (no explicit K transpose).
        logits = _bmm_nt(Q.astype(jnp.bfloat16),
                         K.astype(jnp.bfloat16))               # (H, Lq, Lk)

        # Numerically stable softmax; normalization via EUP approx reciprocal.
        logits = logits - jnp.max(logits, axis=-1, keepdims=True)
        e = jnp.exp(logits)
        denom = jnp.sum(e, axis=-1, keepdims=True)
        p = e * pl.reciprocal(denom, approx=True)              # (H, Lq, Lk)

        attn_ref[b] = p.astype(attn_ref.dtype)

        # Attention output and fc projection, all head-batched in registers.
        o = _bmm_nn(p.astype(jnp.bfloat16),
                    V.astype(jnp.bfloat16))                    # (H, Lq, d_v)
        o_proj = _bmm_nn(o.astype(jnp.bfloat16), wfc)          # (H, Lq, D)

        out_b = jnp.sum(o_proj, axis=0) + q[b]                 # + residual
        out_ref[b] = out_b.astype(out_ref.dtype)


def multi_head_attention(q, k, v, wq, wk, wv, wfc, gamma, beta,
                         *, n_head, d_k, d_v, block_b=None):
    sz_b, len_q, d_model = q.shape
    len_k = k.shape[1]
    len_v = v.shape[1]

    # More than one batch element per grid step (amortizes per-step overhead).
    if block_b is None:
        block_b = 1
        for cand in (8, 4, 2):
            if sz_b % cand == 0:
                block_b = cand
                break
    assert sz_b % block_b == 0, "block_b must divide batch size"

    # One-time (wrapper / XLA) weight massaging: fold 1/sqrt(d_k) into Wq,
    # go head-major, cast to bf16. k/v activations shipped as bf16.
    scale = 1.0 / (d_k ** 0.5)
    wq_hm = (wq * scale).reshape(d_model, n_head, d_k).transpose(1, 0, 2)
    wq_hm = wq_hm.astype(jnp.bfloat16)
    wk_hm = wk.reshape(d_model, n_head, d_k).transpose(1, 0, 2).astype(jnp.bfloat16)
    wv_hm = wv.reshape(d_model, n_head, d_v).transpose(1, 0, 2).astype(jnp.bfloat16)
    wfc_hm = wfc.reshape(n_head, d_v, d_model).astype(jnp.bfloat16)
    gamma2 = gamma.reshape(1, d_model).astype(jnp.float32)
    beta2 = beta.reshape(1, d_model).astype(jnp.float32)
    k_b = k.astype(jnp.bfloat16)
    v_b = v.astype(jnp.bfloat16)

    kernel = functools.partial(_mha_kernel, n_head=n_head)

    # Explicit scoped-VMEM budget with headroom (v7x has only 64 MiB physical).
    def nbytes(shape, dt):
        return math.prod(shape) * jnp.dtype(dt).itemsize

    est = 2 * (nbytes((block_b, len_q, d_model), jnp.float32)      # q (dbl-buf)
               + nbytes((block_b, len_k, d_model), jnp.bfloat16)   # k
               + nbytes((block_b, len_v, d_model), jnp.bfloat16)   # v
               + nbytes((block_b, len_q, d_model), jnp.float32)    # out
               + nbytes((block_b, n_head, len_q, len_k), jnp.float32))  # attn
    est += 2 * (2 * nbytes((n_head, d_model, d_k), jnp.bfloat16)
                + nbytes((n_head, d_model, d_v), jnp.bfloat16)
                + nbytes((n_head, d_v, d_model), jnp.bfloat16)
                + 2 * nbytes((1, d_model), jnp.float32))
    vmem_limit = int(min(max(4 * est, 32 * 2**20), 60 * 2**20))

    grid = (sz_b // block_b,)

    out, attn = pl.pallas_call(
        kernel,
        out_shape=(
            jax.ShapeDtypeStruct((sz_b, len_q, d_model), q.dtype),
            jax.ShapeDtypeStruct((sz_b, n_head, len_q, len_k), jnp.float32),
        ),
        grid_spec=pltpu.PrefetchScalarGridSpec(
            num_scalar_prefetch=0,
            grid=grid,
            in_specs=[
                pl.BlockSpec((block_b, len_q, d_model), lambda b: (b, 0, 0)),
                pl.BlockSpec((block_b, len_k, d_model), lambda b: (b, 0, 0)),
                pl.BlockSpec((block_b, len_v, d_model), lambda b: (b, 0, 0)),
                pl.BlockSpec((n_head, d_model, d_k), lambda b: (0, 0, 0)),
                pl.BlockSpec((n_head, d_model, d_k), lambda b: (0, 0, 0)),
                pl.BlockSpec((n_head, d_model, d_v), lambda b: (0, 0, 0)),
                pl.BlockSpec((n_head, d_v, d_model), lambda b: (0, 0, 0)),
                pl.BlockSpec((1, d_model), lambda b: (0, 0)),
                pl.BlockSpec((1, d_model), lambda b: (0, 0)),
            ],
            out_specs=[
                pl.BlockSpec((block_b, len_q, d_model), lambda b: (b, 0, 0)),
                pl.BlockSpec((block_b, n_head, len_q, len_k),
                             lambda b: (b, 0, 0, 0)),
            ],
        ),
        compiler_params=pltpu.CompilerParams(
            dimension_semantics=("parallel",),
            vmem_limit_bytes=vmem_limit,
        ),
    )(q, k_b, v_b, wq_hm, wk_hm, wv_hm, wfc_hm, gamma2, beta2)

    if len_q == 1:
        out = out.reshape(sz_b, d_model)
    return out, attn


def reference(q, k, v, wq, wk, wv, wfc, gamma, beta, *, n_head, d_k, d_v):
    """Pure-JAX f32 reference matching the PyTorch forward (eval mode)."""
    sz_b, len_q, d_model = q.shape
    residual = q
    mean = q.mean(-1, keepdims=True)
    var = ((q - mean) ** 2).mean(-1, keepdims=True)
    qn = (q - mean) / jnp.sqrt(var + 1e-6) * gamma + beta
    Q = (qn @ wq).reshape(sz_b, len_q, n_head, d_k).transpose(0, 2, 1, 3)
    K = (k @ wk).reshape(sz_b, -1, n_head, d_k).transpose(0, 2, 1, 3)
    V = (v @ wv).reshape(sz_b, -1, n_head, d_v).transpose(0, 2, 1, 3)
    logits = jnp.einsum('bhqd,bhkd->bhqk', Q / (d_k ** 0.5), K)
    attn = jax.nn.softmax(logits, axis=-1)
    O = jnp.einsum('bhqk,bhkd->bhqd', attn, V)
    O = O.transpose(0, 2, 1, 3).reshape(sz_b, len_q, n_head * d_v)
    out = O @ wfc + residual
    if len_q == 1:
        out = out.reshape(sz_b, d_model)
    return out, attn


if __name__ == "__main__":
    # Small, module-consistent shapes.
    sz_b, seq, d_model = 2, 8, 32
    n_head, d_k, d_v = 4, 8, 8

    key = jax.random.PRNGKey(0)
    ks = jax.random.split(key, 9)
    q = jax.random.normal(ks[0], (sz_b, seq, d_model), jnp.float32)
    k = jax.random.normal(ks[1], (sz_b, seq, d_model), jnp.float32)
    v = jax.random.normal(ks[2], (sz_b, seq, d_model), jnp.float32)

    # Deterministic synthetic parameters (pre-transposed: (in, out)).
    wq = 0.1 * jax.random.normal(ks[3], (d_model, n_head * d_k), jnp.float32)
    wk = 0.1 * jax.random.normal(ks[4], (d_model, n_head * d_k), jnp.float32)
    wv = 0.1 * jax.random.normal(ks[5], (d_model, n_head * d_v), jnp.float32)
    wfc = 0.1 * jax.random.normal(ks[6], (n_head * d_v, d_model), jnp.float32)
    gamma = 1.0 + 0.05 * jax.random.normal(ks[7], (d_model,), jnp.float32)
    beta = 0.05 * jax.random.normal(ks[8], (d_model,), jnp.float32)

    out, attn = multi_head_attention(q, k, v, wq, wk, wv, wfc, gamma, beta,
                                     n_head=n_head, d_k=d_k, d_v=d_v)
    jax.block_until_ready((out, attn))

    out_ref, attn_ref = reference(q, k, v, wq, wk, wv, wfc, gamma, beta,
                                  n_head=n_head, d_k=d_k, d_v=d_v)
    # Tolerances loosened vs. the f32 reference because the kernel runs its
    # matmuls in bf16 (f32 accumulation) and uses an approximate reciprocal.
    assert jnp.allclose(out, out_ref, atol=3e-2, rtol=3e-2), "output mismatch"
    assert jnp.allclose(attn, attn_ref, atol=2e-2, rtol=2e-2), "attn mismatch"

    print("KERNEL_OK")
</pallas_src>

<mosaic_0001>
module attributes {stable_mosaic.version = 11 : i64} {
  func.func @_mha_kernel(%arg0: i32, %arg1: memref<2x8x32xf32, #tpu.memory_space<vmem>>, %arg2: memref<2x8x32xbf16, #tpu.memory_space<vmem>>, %arg3: memref<2x8x32xbf16, #tpu.memory_space<vmem>>, %arg4: memref<4x32x8xbf16, #tpu.memory_space<vmem>>, %arg5: memref<4x32x8xbf16, #tpu.memory_space<vmem>>, %arg6: memref<4x32x8xbf16, #tpu.memory_space<vmem>>, %arg7: memref<4x8x32xbf16, #tpu.memory_space<vmem>>, %arg8: memref<1x32xf32, #tpu.memory_space<vmem>>, %arg9: memref<1x32xf32, #tpu.memory_space<vmem>>, %arg10: memref<2x8x32xf32, #tpu.memory_space<vmem>>, %arg11: memref<2x4x8x8xf32, #tpu.memory_space<vmem>>) attributes {dimension_semantics = [#tpu.dimension_semantics<parallel>], iteration_bounds = array<i64: 1>, scalar_prefetch = 0 : i64, scratch_operands = 0 : i64, tpu.core_type = #tpu.core_type<tc>, window_params = [{transform_indices = @transform_0, window_bounds = array<i64: 2, 8, 32>}, {transform_indices = @transform_1, window_bounds = array<i64: 2, 8, 32>}, {transform_indices = @transform_2, window_bounds = array<i64: 2, 8, 32>}, {pipeline_mode = #tpu.pipeline_mode<synchronous>, transform_indices = @transform_3, window_bounds = array<i64: 4, 32, 8>}, {pipeline_mode = #tpu.pipeline_mode<synchronous>, transform_indices = @transform_4, window_bounds = array<i64: 4, 32, 8>}, {pipeline_mode = #tpu.pipeline_mode<synchronous>, transform_indices = @transform_5, window_bounds = array<i64: 4, 32, 8>}, {pipeline_mode = #tpu.pipeline_mode<synchronous>, transform_indices = @transform_6, window_bounds = array<i64: 4, 8, 32>}, {pipeline_mode = #tpu.pipeline_mode<synchronous>, transform_indices = @transform_7, window_bounds = array<i64: 1, 32>}, {pipeline_mode = #tpu.pipeline_mode<synchronous>, transform_indices = @transform_8, window_bounds = array<i64: 1, 32>}, {transform_indices = @transform_9, window_bounds = array<i64: 2, 8, 32>}, {transform_indices = @transform_10, window_bounds = array<i64: 2, 4, 8, 8>}]} {
    %c0 = arith.constant 0 : index
    %c0_0 = arith.constant 0 : index
    %c0_1 = arith.constant 0 : index
    %0 = vector.load %arg1[%c0, %c0_0, %c0_1] : memref<2x8x32xf32, #tpu.memory_space<vmem>>, vector<2x8x32xf32>
    %cst = arith.constant dense<0.000000e+00> : vector<2x8xf32>
    %1 = vector.multi_reduction <add>, %0, %cst [2] : vector<2x8x32xf32> to vector<2x8xf32>
    %2 = vector.shape_cast %1 : vector<2x8xf32> to vector<2x8x1xf32>
    %cst_2 = arith.constant 3.200000e+01 : f32
    %3 = vector.broadcast %cst_2 : f32 to vector<2x8x1xf32>
    %4 = arith.divf %2, %3 : vector<2x8x1xf32>
    %5 = vector.broadcast %4 : vector<2x8x1xf32> to vector<2x8x32xf32>
    %6 = arith.subf %0, %5 : vector<2x8x32xf32>
    %7 = arith.mulf %6, %6 : vector<2x8x32xf32>
    %cst_3 = arith.constant dense<0.000000e+00> : vector<2x8xf32>
    %8 = vector.multi_reduction <add>, %7, %cst_3 [2] : vector<2x8x32xf32> to vector<2x8xf32>
    %9 = vector.shape_cast %8 : vector<2x8xf32> to vector<2x8x1xf32>
    %cst_4 = arith.constant 3.200000e+01 : f32
    %10 = vector.broadcast %cst_4 : f32 to vector<2x8x1xf32>
    %11 = arith.divf %9, %10 : vector<2x8x1xf32>
    %12 = vector.broadcast %4 : vector<2x8x1xf32> to vector<2x8x32xf32>
    %13 = arith.subf %0, %12 : vector<2x8x32xf32>
    %cst_5 = arith.constant 9.99999997E-7 : f32
    %14 = vector.broadcast %cst_5 : f32 to vector<2x8x1xf32>
    %15 = arith.addf %11, %14 : vector<2x8x1xf32>
    %16 = math.rsqrt %15 : vector<2x8x1xf32>
    %17 = vector.broadcast %16 : vector<2x8x1xf32> to vector<2x8x32xf32>
    %18 = arith.mulf %13, %17 : vector<2x8x32xf32>
    %c0_6 = arith.constant 0 : index
    %c0_7 = arith.constant 0 : index
    %19 = vector.load %arg8[%c0_6, %c0_7] : memref<1x32xf32, #tpu.memory_space<vmem>>, vector<1x32xf32>
    %20 = vector.shape_cast %19 : vector<1x32xf32> to vector<1x1x32xf32>
    %21 = vector.broadcast %20 : vector<1x1x32xf32> to vector<2x8x32xf32>
    %22 = arith.mulf %18, %21 : vector<2x8x32xf32>
    %c0_8 = arith.constant 0 : index
    %c0_9 = arith.constant 0 : index
    %23 = vector.load %arg9[%c0_8, %c0_9] : memref<1x32xf32, #tpu.memory_space<vmem>>, vector<1x32xf32>
    %24 = vector.shape_cast %23 : vector<1x32xf32> to vector<1x1x32xf32>
    %25 = vector.broadcast %24 : vector<1x1x32xf32> to vector<2x8x32xf32>
    %26 = arith.addf %22, %25 : vector<2x8x32xf32>
    %27 = arith.truncf %26 : vector<2x8x32xf32> to vector<2x8x32xbf16>
    %c0_10 = arith.constant 0 : index
    %c0_11 = arith.constant 0 : index
    %c0_12 = arith.constant 0 : index
    %28 = vector.load %arg4[%c0_10, %c0_11, %c0_12] : memref<4x32x8xbf16, #tpu.memory_space<vmem>>, vector<4x32x8xbf16>
    %c0_13 = arith.constant 0 : index
    %c0_14 = arith.constant 0 : index
    %c0_15 = arith.constant 0 : index
    %29 = vector.load %arg5[%c0_13, %c0_14, %c0_15] : memref<4x32x8xbf16, #tpu.memory_space<vmem>>, vector<4x32x8xbf16>
    %c0_16 = arith.constant 0 : index
    %c0_17 = arith.constant 0 : index
    %c0_18 = arith.constant 0 : index
    %30 = vector.load %arg6[%c0_16, %c0_17, %c0_18] : memref<4x32x8xbf16, #tpu.memory_space<vmem>>, vector<4x32x8xbf16>
    %c0_19 = arith.constant 0 : index
    %c0_20 = arith.constant 0 : index
    %c0_21 = arith.constant 0 : index
    %31 = vector.load %arg7[%c0_19, %c0_20, %c0_21] : memref<4x8x32xbf16, #tpu.memory_space<vmem>>, vector<4x8x32xbf16>
    %32 = vector.extract_strided_slice %27 {offsets = [0, 0, 0], sizes = [1, 8, 32], strides = [1, 1, 1]} : vector<2x8x32xbf16> to vector<1x8x32xbf16>
    %33 = vector.shape_cast %32 : vector<1x8x32xbf16> to vector<8x32xbf16>
    %34 = vector.shape_cast %33 : vector<8x32xbf16> to vector<1x8x32xbf16>
    %35 = vector.shape_cast %34 : vector<1x8x32xbf16> to vector<1x8x32xbf16>
    %36 = vector.broadcast %35 : vector<1x8x32xbf16> to vector<4x8x32xbf16>
    %c0_22 = arith.constant 0 : index
    %c0_23 = arith.constant 0 : index
    %c0_24 = arith.constant 0 : index
    %37 = vector.load %arg2[%c0_22, %c0_23, %c0_24] : memref<2x8x32xbf16, #tpu.memory_space<vmem>>, vector<1x8x32xbf16>
    %38 = vector.shape_cast %37 : vector<1x8x32xbf16> to vector<8x32xbf16>
    %39 = vector.shape_cast %38 : vector<8x32xbf16> to vector<1x8x32xbf16>
    %40 = vector.shape_cast %39 : vector<1x8x32xbf16> to vector<1x8x32xbf16>
    %41 = vector.broadcast %40 : vector<1x8x32xbf16> to vector<4x8x32xbf16>
    %c0_25 = arith.constant 0 : index
    %c0_26 = arith.constant 0 : index
    %c0_27 = arith.constant 0 : index
    %42 = vector.load %arg3[%c0_25, %c0_26, %c0_27] : memref<2x8x32xbf16, #tpu.memory_space<vmem>>, vector<1x8x32xbf16>
    %43 = vector.shape_cast %42 : vector<1x8x32xbf16> to vector<8x32xbf16>
    %44 = vector.shape_cast %43 : vector<8x32xbf16> to vector<1x8x32xbf16>
    %45 = vector.shape_cast %44 : vector<1x8x32xbf16> to vector<1x8x32xbf16>
    %46 = vector.broadcast %45 : vector<1x8x32xbf16> to vector<4x8x32xbf16>
    %cst_28 = arith.constant dense<0.000000e+00> : vector<4x8x8xf32>
    %47 = tpu.matmul %36, %28, %cst_28 {dimension_numbers = #tpu.dot_dimension_numbers<[2], [1], [1], [2], [0, 0, 0, 1, 1, 2], [0], [0]>} : vector<4x8x32xbf16>, vector<4x32x8xbf16>, vector<4x8x8xf32> -> vector<4x8x8xf32>
    %cst_29 = arith.constant dense<0.000000e+00> : vector<4x8x8xf32>
    %48 = tpu.matmul %41, %29, %cst_29 {dimension_numbers = #tpu.dot_dimension_numbers<[2], [1], [1], [2], [0, 0, 0, 1, 1, 2], [0], [0]>} : vector<4x8x32xbf16>, vector<4x32x8xbf16>, vector<4x8x8xf32> -> vector<4x8x8xf32>
    %cst_30 = arith.constant dense<0.000000e+00> : vector<4x8x8xf32>
    %49 = tpu.matmul %46, %30, %cst_30 {dimension_numbers = #tpu.dot_dimension_numbers<[2], [1], [1], [2], [0, 0, 0, 1, 1, 2], [0], [0]>} : vector<4x8x32xbf16>, vector<4x32x8xbf16>, vector<4x8x8xf32> -> vector<4x8x8xf32>
    %50 = arith.truncf %47 : vector<4x8x8xf32> to vector<4x8x8xbf16>
    %51 = arith.truncf %48 : vector<4x8x8xf32> to vector<4x8x8xbf16>
    %cst_31 = arith.constant dense<0.000000e+00> : vector<4x8x8xf32>
    %52 = tpu.matmul %50, %51, %cst_31 {dimension_numbers = #tpu.dot_dimension_numbers<[2], [2], [1], [1], [0, 0, 0, 1, 1, 1], [0], [0]>} : vector<4x8x8xbf16>, vector<4x8x8xbf16>, vector<4x8x8xf32> -> vector<4x8x8xf32>
    %cst_32 = arith.constant dense<0xFF800000> : vector<4x8xf32>
    %53 = vector.multi_reduction <maximumf>, %52, %cst_32 [2] : vector<4x8x8xf32> to vector<4x8xf32>
    %54 = vector.shape_cast %53 : vector<4x8xf32> to vector<4x8x1xf32>
    %55 = vector.broadcast %54 : vector<4x8x1xf32> to vector<4x8x8xf32>
    %56 = arith.subf %52, %55 : vector<4x8x8xf32>
    %57 = math.exp %56 : vector<4x8x8xf32>
    %cst_33 = arith.constant dense<0.000000e+00> : vector<4x8xf32>
    %58 = vector.multi_reduction <add>, %57, %cst_33 [2] : vector<4x8x8xf32> to vector<4x8xf32>
    %59 = vector.shape_cast %58 : vector<4x8xf32> to vector<4x8x1xf32>
    %60 = tpu.reciprocal %59 {approx = true} : vector<4x8x1xf32> -> vector<4x8x1xf32>
    %61 = vector.broadcast %60 : vector<4x8x1xf32> to vector<4x8x8xf32>
    %62 = arith.mulf %57, %61 : vector<4x8x8xf32>
    %c0_34 = arith.constant 0 : index
    %c0_35 = arith.constant 0 : index
    %c0_36 = arith.constant 0 : index
    %c0_37 = arith.constant 0 : index
    %63 = vector.load %arg11[%c0_34, %c0_35, %c0_36, %c0_37] : memref<2x4x8x8xf32, #tpu.memory_space<vmem>>, vector<1x4x8x8xf32>
    %64 = vector.shape_cast %63 : vector<1x4x8x8xf32> to vector<4x8x8xf32>
    %65 = vector.shape_cast %62 : vector<4x8x8xf32> to vector<1x4x8x8xf32>
    tpu.vector_store %arg11[%c0_34, %c0_35, %c0_36, %c0_37], %65 {strides = array<i32>} : memref<2x4x8x8xf32, #tpu.memory_space<vmem>>, vector<1x4x8x8xf32>,
    %66 = arith.truncf %62 : vector<4x8x8xf32> to vector<4x8x8xbf16>
    %67 = arith.truncf %49 : vector<4x8x8xf32> to vector<4x8x8xbf16>
    %cst_38 = arith.constant dense<0.000000e+00> : vector<4x8x8xf32>
    %68 = tpu.matmul %66, %67, %cst_38 {dimension_numbers = #tpu.dot_dimension_numbers<[2], [1], [1], [2], [0, 0, 0, 1, 1, 2], [0], [0]>} : vector<4x8x8xbf16>, vector<4x8x8xbf16>, vector<4x8x8xf32> -> vector<4x8x8xf32>
    %69 = arith.truncf %68 : vector<4x8x8xf32> to vector<4x8x8xbf16>
    %cst_39 = arith.constant dense<0.000000e+00> : vector<4x8x32xf32>
    %70 = tpu.matmul %69, %31, %cst_39 {dimension_numbers = #tpu.dot_dimension_numbers<[2], [1], [1], [2], [0, 0, 0, 1, 1, 2], [0], [0]>} : vector<4x8x8xbf16>, vector<4x8x32xbf16>, vector<4x8x32xf32> -> vector<4x8x32xf32>
    %cst_40 = arith.constant dense<0.000000e+00> : vector<8x32xf32>
    %71 = vector.multi_reduction <add>, %70, %cst_40 [0] : vector<4x8x32xf32> to vector<8x32xf32>
    %72 = vector.extract_strided_slice %0 {offsets = [0, 0, 0], sizes = [1, 8, 32], strides = [1, 1, 1]} : vector<2x8x32xf32> to vector<1x8x32xf32>
    %73 = vector.shape_cast %72 : vector<1x8x32xf32> to vector<8x32xf32>
    %74 = arith.addf %71, %73 : vector<8x32xf32>
    %c0_41 = arith.constant 0 : index
    %c0_42 = arith.constant 0 : index
    %c0_43 = arith.constant 0 : index
    %75 = vector.load %arg10[%c0_41, %c0_42, %c0_43] : memref<2x8x32xf32, #tpu.memory_space<vmem>>, vector<1x8x32xf32>
    %76 = vector.shape_cast %75 : vector<1x8x32xf32> to vector<8x32xf32>
    %77 = vector.shape_cast %74 : vector<8x32xf32> to vector<1x8x32xf32>
    tpu.vector_store %arg10[%c0_41, %c0_42, %c0_43], %77 {strides = array<i32>} : memref<2x8x32xf32, #tpu.memory_space<vmem>>, vector<1x8x32xf32>,
    %78 = vector.extract_strided_slice %27 {offsets = [1, 0, 0], sizes = [1, 8, 32], strides = [1, 1, 1]} : vector<2x8x32xbf16> to vector<1x8x32xbf16>
    %79 = vector.shape_cast %78 : vector<1x8x32xbf16> to vector<8x32xbf16>
    %80 = vector.shape_cast %79 : vector<8x32xbf16> to vector<1x8x32xbf16>
    %81 = vector.shape_cast %80 : vector<1x8x32xbf16> to vector<1x8x32xbf16>
    %82 = vector.broadcast %81 : vector<1x8x32xbf16> to vector<4x8x32xbf16>
    %c1 = arith.constant 1 : index
    %c0_44 = arith.constant 0 : index
    %c0_45 = arith.constant 0 : index
    %83 = vector.load %arg2[%c1, %c0_44, %c0_45] : memref<2x8x32xbf16, #tpu.memory_space<vmem>>, vector<1x8x32xbf16>
    %84 = vector.shape_cast %83 : vector<1x8x32xbf16> to vector<8x32xbf16>
    %85 = vector.shape_cast %84 : vector<8x32xbf16> to vector<1x8x32xbf16>
    %86 = vector.shape_cast %85 : vector<1x8x32xbf16> to vector<1x8x32xbf16>
    %87 = vector.broadcast %86 : vector<1x8x32xbf16> to vector<4x8x32xbf16>
    %c1_46 = arith.constant 1 : index
    %c0_47 = arith.constant 0 : index
    %c0_48 = arith.constant 0 : index
    %88 = vector.load %arg3[%c1_46, %c0_47, %c0_48] : memref<2x8x32xbf16, #tpu.memory_space<vmem>>, vector<1x8x32xbf16>
    %89 = vector.shape_cast %88 : vector<1x8x32xbf16> to vector<8x32xbf16>
    %90 = vector.shape_cast %89 : vector<8x32xbf16> to vector<1x8x32xbf16>
    %91 = vector.shape_cast %90 : vector<1x8x32xbf16> to vector<1x8x32xbf16>
    %92 = vector.broadcast %91 : vector<1x8x32xbf16> to vector<4x8x32xbf16>
    %cst_49 = arith.constant dense<0.000000e+00> : vector<4x8x8xf32>
    %93 = tpu.matmul %82, %28, %cst_49 {dimension_numbers = #tpu.dot_dimension_numbers<[2], [1], [1], [2], [0, 0, 0, 1, 1, 2], [0], [0]>} : vector<4x8x32xbf16>, vector<4x32x8xbf16>, vector<4x8x8xf32> -> vector<4x8x8xf32>
    %cst_50 = arith.constant dense<0.000000e+00> : vector<4x8x8xf32>
    %94 = tpu.matmul %87, %29, %cst_50 {dimension_numbers = #tpu.dot_dimension_numbers<[2], [1], [1], [2], [0, 0, 0, 1, 1, 2], [0], [0]>} : vector<4x8x32xbf16>, vector<4x32x8xbf16>, vector<4x8x8xf32> -> vector<4x8x8xf32>
    %cst_51 = arith.constant dense<0.000000e+00> : vector<4x8x8xf32>
    %95 = tpu.matmul %92, %30, %cst_51 {dimension_numbers = #tpu.dot_dimension_numbers<[2], [1], [1], [2], [0, 0, 0, 1, 1, 2], [0], [0]>} : vector<4x8x32xbf16>, vector<4x32x8xbf16>, vector<4x8x8xf32> -> vector<4x8x8xf32>
    %96 = arith.truncf %93 : vector<4x8x8xf32> to vector<4x8x8xbf16>
    %97 = arith.truncf %94 : vector<4x8x8xf32> to vector<4x8x8xbf16>
    %cst_52 = arith.constant dense<0.000000e+00> : vector<4x8x8xf32>
    %98 = tpu.matmul %96, %97, %cst_52 {dimension_numbers = #tpu.dot_dimension_numbers<[2], [2], [1], [1], [0, 0, 0, 1, 1, 1], [0], [0]>} : vector<4x8x8xbf16>, vector<4x8x8xbf16>, vector<4x8x8xf32> -> vector<4x8x8xf32>
    %cst_53 = arith.constant dense<0xFF800000> : vector<4x8xf32>
    %99 = vector.multi_reduction <maximumf>, %98, %cst_53 [2] : vector<4x8x8xf32> to vector<4x8xf32>
    %100 = vector.shape_cast %99 : vector<4x8xf32> to vector<4x8x1xf32>
    %101 = vector.broadcast %100 : vector<4x8x1xf32> to vector<4x8x8xf32>
    %102 = arith.subf %98, %101 : vector<4x8x8xf32>
    %103 = math.exp %102 : vector<4x8x8xf32>
    %cst_54 = arith.constant dense<0.000000e+00> : vector<4x8xf32>
    %104 = vector.multi_reduction <add>, %103, %cst_54 [2] : vector<4x8x8xf32> to vector<4x8xf32>
    %105 = vector.shape_cast %104 : vector<4x8xf32> to vector<4x8x1xf32>
    %106 = tpu.reciprocal %105 {approx = true} : vector<4x8x1xf32> -> vector<4x8x1xf32>
    %107 = vector.broadcast %106 : vector<4x8x1xf32> to vector<4x8x8xf32>
    %108 = arith.mulf %103, %107 : vector<4x8x8xf32>
    %c1_55 = arith.constant 1 : index
    %c0_56 = arith.constant 0 : index
    %c0_57 = arith.constant 0 : index
    %c0_58 = arith.constant 0 : index
    %109 = vector.load %arg11[%c1_55, %c0_56, %c0_57, %c0_58] : memref<2x4x8x8xf32, #tpu.memory_space<vmem>>, vector<1x4x8x8xf32>
    %110 = vector.shape_cast %109 : vector<1x4x8x8xf32> to vector<4x8x8xf32>
    %111 = vector.shape_cast %108 : vector<4x8x8xf32> to vector<1x4x8x8xf32>
    tpu.vector_store %arg11[%c1_55, %c0_56, %c0_57, %c0_58], %111 {strides = array<i32>} : memref<2x4x8x8xf32, #tpu.memory_space<vmem>>, vector<1x4x8x8xf32>,
    %112 = arith.truncf %108 : vector<4x8x8xf32> to vector<4x8x8xbf16>
    %113 = arith.truncf %95 : vector<4x8x8xf32> to vector<4x8x8xbf16>
    %cst_59 = arith.constant dense<0.000000e+00> : vector<4x8x8xf32>
    %114 = tpu.matmul %112, %113, %cst_59 {dimension_numbers = #tpu.dot_dimension_numbers<[2], [1], [1], [2], [0, 0, 0, 1, 1, 2], [0], [0]>} : vector<4x8x8xbf16>, vector<4x8x8xbf16>, vector<4x8x8xf32> -> vector<4x8x8xf32>
    %115 = arith.truncf %114 : vector<4x8x8xf32> to vector<4x8x8xbf16>
    %cst_60 = arith.constant dense<0.000000e+00> : vector<4x8x32xf32>
    %116 = tpu.matmul %115, %31, %cst_60 {dimension_numbers = #tpu.dot_dimension_numbers<[2], [1], [1], [2], [0, 0, 0, 1, 1, 2], [0], [0]>} : vector<4x8x8xbf16>, vector<4x8x32xbf16>, vector<4x8x32xf32> -> vector<4x8x32xf32>
    %cst_61 = arith.constant dense<0.000000e+00> : vector<8x32xf32>
    %117 = vector.multi_reduction <add>, %116, %cst_61 [0] : vector<4x8x32xf32> to vector<8x32xf32>
    %118 = vector.extract_strided_slice %0 {offsets = [1, 0, 0], sizes = [1, 8, 32], strides = [1, 1, 1]} : vector<2x8x32xf32> to vector<1x8x32xf32>
    %119 = vector.shape_cast %118 : vector<1x8x32xf32> to vector<8x32xf32>
    %120 = arith.addf %117, %119 : vector<8x32xf32>
    %c1_62 = arith.constant 1 : index
    %c0_63 = arith.constant 0 : index
    %c0_64 = arith.constant 0 : index
    %121 = vector.load %arg10[%c1_62, %c0_63, %c0_64] : memref<2x8x32xf32, #tpu.memory_space<vmem>>, vector<1x8x32xf32>
    %122 = vector.shape_cast %121 : vector<1x8x32xf32> to vector<8x32xf32>
    %123 = vector.shape_cast %120 : vector<8x32xf32> to vector<1x8x32xf32>
    tpu.vector_store %arg10[%c1_62, %c0_63, %c0_64], %123 {strides = array<i32>} : memref<2x8x32xf32, #tpu.memory_space<vmem>>, vector<1x8x32xf32>,
    return
  }
  func.func @transform_0(%arg0: i32) -> (i32, i32, i32) {
    %c0_i32 = arith.constant 0 : i32
    %c0_i32_0 = arith.constant 0 : i32
    %c0_i32_1 = arith.constant 0 : i32
    return %arg0, %c0_i32, %c0_i32_0 : i32, i32, i32
  }
  func.func @transform_1(%arg0: i32) -> (i32, i32, i32) {
    %c0_i32 = arith.constant 0 : i32
    %c0_i32_0 = arith.constant 0 : i32
    %c0_i32_1 = arith.constant 0 : i32
    return %arg0, %c0_i32, %c0_i32_0 : i32, i32, i32
  }
  func.func @transform_2(%arg0: i32) -> (i32, i32, i32) {
    %c0_i32 = arith.constant 0 : i32
    %c0_i32_0 = arith.constant 0 : i32
    %c0_i32_1 = arith.constant 0 : i32
    return %arg0, %c0_i32, %c0_i32_0 : i32, i32, i32
  }
  func.func @transform_3(%arg0: i32) -> (i32, i32, i32) {
    %c0_i32 = arith.constant 0 : i32
    %c0_i32_0 = arith.constant 0 : i32
    %c0_i32_1 = arith.constant 0 : i32
    %c0_i32_2 = arith.constant 0 : i32
    return %c0_i32, %c0_i32_0, %c0_i32_1 : i32, i32, i32
  }
  func.func @transform_4(%arg0: i32) -> (i32, i32, i32) {
    %c0_i32 = arith.constant 0 : i32
    %c0_i32_0 = arith.constant 0 : i32
    %c0_i32_1 = arith.constant 0 : i32
    %c0_i32_2 = arith.constant 0 : i32
    return %c0_i32, %c0_i32_0, %c0_i32_1 : i32, i32, i32
  }
  func.func @transform_5(%arg0: i32) -> (i32, i32, i32) {
    %c0_i32 = arith.constant 0 : i32
    %c0_i32_0 = arith.constant 0 : i32
    %c0_i32_1 = arith.constant 0 : i32
    %c0_i32_2 = arith.constant 0 : i32
    return %c0_i32, %c0_i32_0, %c0_i32_1 : i32, i32, i32
  }
  func.func @transform_6(%arg0: i32) -> (i32, i32, i32) {
    %c0_i32 = arith.constant 0 : i32
    %c0_i32_0 = arith.constant 0 : i32
    %c0_i32_1 = arith.constant 0 : i32
    %c0_i32_2 = arith.constant 0 : i32
    return %c0_i32, %c0_i32_0, %c0_i32_1 : i32, i32, i32
  }
  func.func @transform_7(%arg0: i32) -> (i32, i32) {
    %c0_i32 = arith.constant 0 : i32
    %c0_i32_0 = arith.constant 0 : i32
    %c0_i32_1 = arith.constant 0 : i32
    return %c0_i32, %c0_i32_0 : i32, i32
  }
  func.func @transform_8(%arg0: i32) -> (i32, i32) {
    %c0_i32 = arith.constant 0 : i32
    %c0_i32_0 = arith.constant 0 : i32
    %c0_i32_1 = arith.constant 0 : i32
    return %c0_i32, %c0_i32_0 : i32, i32
  }
  func.func @transform_9(%arg0: i32) -> (i32, i32, i32) {
    %c0_i32 = arith.constant 0 : i32
    %c0_i32_0 = arith.constant 0 : i32
    %c0_i32_1 = arith.constant 0 : i32
    return %arg0, %c0_i32, %c0_i32_0 : i32, i32, i32
  }
  func.func @transform_10(%arg0: i32) -> (i32, i32, i32, i32) {
    %c0_i32 = arith.constant 0 : i32
    %c0_i32_0 = arith.constant 0 : i32
    %c0_i32_1 = arith.constant 0 : i32
    %c0_i32_2 = arith.constant 0 : i32
    return %arg0, %c0_i32, %c0_i32_0, %c0_i32_1 : i32, i32, i32, i32
  }
}

</mosaic_0001>

<llo_original>
// kernel: tpu_custom_call.1
$region0: #{tpu_custom_call.1}
  #allocation0 [shape = 'u32[]', space=smem, size = 0x4, offset = 0x4, fixed_abs, tag = 'smem constant byte address 0x4 - core index']
  #allocation1 [shape = 'u32[72,128]{1,0:T(1,128)}', space=vmem, size = 0x9000, scoped, tag = 'internal scratch']
  %s0 = inlined_call_operand.vmem [shape: f32[2,8,32], index: 0, kind: input, shape index: {}]
  %s1 = inlined_call_operand.vmem [shape: bf16[2,8,32], index: 1, kind: input, shape index: {}]
  %s2 = inlined_call_operand.vmem [shape: bf16[2,8,32], index: 2, kind: input, shape index: {}]
  %s3 = inlined_call_operand.vmem [shape: bf16[4,32,8], index: 3, kind: input, shape index: {}]
  %s4 = inlined_call_operand.vmem [shape: bf16[4,32,8], index: 4, kind: input, shape index: {}]
  %s5 = inlined_call_operand.vmem [shape: bf16[4,32,8], index: 5, kind: input, shape index: {}]
  %s6 = inlined_call_operand.vmem [shape: bf16[4,8,32], index: 6, kind: input, shape index: {}]
  %s7 = inlined_call_operand.vmem [shape: f32[1,32], index: 7, kind: input, shape index: {}]
  %s8 = inlined_call_operand.vmem [shape: f32[1,32], index: 8, kind: input, shape index: {}]
  %s9 = inlined_call_operand.hbm [shape: f32[2,8,32], index: 9, kind: output, shape index: {0}]
  %s10 = inlined_call_operand.hbm [shape: f32[2,4,8,8], index: 10, kind: output, shape index: {1}]
  %11 = xla_tuple %s9, %s10
  %s12 = sld [smem:[#allocation0]]
  $region54: #{tpu_custom_call.1} parent=0
    _
  %s14 = ssub.s32 1, %s12
  %s15 = scalar_select 0, %s14, %s12
  $region1: #{tpu_custom_call.1} parent=0
    #allocation2 [shape = 'u8[8192]{0}', space=vmem, size = 0x2000, scoped, tag = 'output window, operand 0, single buffered']
    #allocation3 [shape = 's32[1]{0}', space=sflag, size = 0x4, scoped, tag = 'scoped memory for tpu_custom_call.1']
    #allocation4 [shape = 'u8[32768]{0}', space=vmem, size = 0x8000, scoped, tag = 'output window, operand 1, single buffered']
    #allocation5 [shape = 's32[1]{0}', space=sflag, size = 0x4, scoped, tag = 'scoped memory for tpu_custom_call.1']
    %16 = vsyncpa [#allocation3], 0
    %17 = vsyncpa [#allocation5], 0
    // Predicated region
    $region2: #{tpu_custom_call.1} parent=1 // pred_check
      _
    $region3: #{tpu_custom_call.1} parent=1 // pred_check_branch
      %19 = sbr.rel (0) target = $region5
    $region4: #{tpu_custom_call.1} parent=1 // pred_region
      _
    $region5: #{tpu_custom_call.1} parent=1 // pred_fallthru
      _
    // Predicated region
    $region6: #{tpu_custom_call.1} parent=1 // pred_check
      _
    $region7: #{tpu_custom_call.1} parent=1 // pred_check_branch
      %21 = sbr.rel (0) target = $region9
    $region8: #{tpu_custom_call.1} parent=1 // pred_region
      _
    $region9: #{tpu_custom_call.1} parent=1 // pred_fallthru
      _
    // Predicated region
    $region10: #{tpu_custom_call.1} parent=1 // pred_check
      _
    $region11: #{tpu_custom_call.1} parent=1 // pred_check_branch
      %23 = sbr.rel (0) target = $region13
    $region12: #{tpu_custom_call.1} parent=1 // pred_region
      _
    $region13: #{tpu_custom_call.1} parent=1 // pred_fallthru
      _
    // Predicated region
    $region14: #{tpu_custom_call.1} parent=1 // pred_check
      _
    $region15: #{tpu_custom_call.1} parent=1 // pred_check_branch
      %25 = sbr.rel (0) target = $region17
    $region16: #{tpu_custom_call.1} parent=1 // pred_region
      _
    $region17: #{tpu_custom_call.1} parent=1 // pred_fallthru
      _
    // Predicated region
    $region18: #{tpu_custom_call.1} parent=1 // pred_check
      _
    $region19: #{tpu_custom_call.1} parent=1 // pred_check_branch
      %27 = sbr.rel (0) target = $region21
    $region20: #{tpu_custom_call.1} parent=1 // pred_region
      _
    $region21: #{tpu_custom_call.1} parent=1 // pred_fallthru
      _
    // Predicated region
    $region22: #{tpu_custom_call.1} parent=1 // pred_check
      _
    $region23: #{tpu_custom_call.1} parent=1 // pred_check_branch
      %29 = sbr.rel (0) target = $region25
    $region24: #{tpu_custom_call.1} parent=1 // pred_region
      _
    $region25: #{tpu_custom_call.1} parent=1 // pred_fallthru
      _
    // Predicated region
    $region26: #{tpu_custom_call.1} parent=1 // pred_check
      _
    $region27: #{tpu_custom_call.1} parent=1 // pred_check_branch
      %31 = sbr.rel (0) target = $region29
    $region28: #{tpu_custom_call.1} parent=1 // pred_region
      _
    $region29: #{tpu_custom_call.1} parent=1 // pred_fallthru
      _
    // Predicated region
    $region30: #{tpu_custom_call.1} parent=1 // pred_check
      _
    $region31: #{tpu_custom_call.1} parent=1 // pred_check_branch
      %33 = sbr.rel (0) target = $region33
    $region32: #{tpu_custom_call.1} parent=1 // pred_region
      _
    $region33: #{tpu_custom_call.1} parent=1 // pred_fallthru
      _
    // Predicated region
    $region34: #{tpu_custom_call.1} parent=1 // pred_check
      _
    $region35: #{tpu_custom_call.1} parent=1 // pred_check_branch
      %35 = sbr.rel (0) target = $region37
    $region36: #{tpu_custom_call.1} parent=1 // pred_region
      _
    $region37: #{tpu_custom_call.1} parent=1 // pred_fallthru
      _
    %v37 = vld [vmem:[%s0] sm:$0xff]
    %v38 = vld [vmem:[%s0 + $0x8] sm:$0xff]
    %vm39 = vcmask 261120
    %v40 = vsel %vm39, %v37, 0.0
    %41 = vadd.xlane.f32.xlu0 %v40
    %v42 = vpop.xlane.xlu0 %41
    %v43 = vsel %vm39, %v38, 0.0
    %44 = vadd.xlane.f32.xlu0 %v43
    %v45 = vpop.xlane.xlu0 %44
    %v46 = vrcp.pop 32.0
    %v47 = vmul.f32 32.0, %v46
    %v48 = vsub.f32 1.0, %v47
    %v49 = vmul.f32 %v46, %v48
    %v50 = vadd.f32 %v46, %v49
    %vm51 = vweird.f32 %v46
    %v52 = vsel %vm51, %v46, %v50
    %v53 = vmul.f32 %v42, %v52
    %v54 = vmul.f32 %v45, %v52
    %v55 = vsub.f32 %v37, %v53
    %v56 = vsub.f32 %v38, %v54
    %v57 = vmul.f32 %v55, %v55
    %v58 = vmul.f32 %v56, %v56
    %v59 = vsel %vm39, %v57, 0.0
    %60 = vadd.xlane.f32.xlu0 %v59
    %v61 = vpop.xlane.xlu0 %60
    %v62 = vsel %vm39, %v58, 0.0
    %63 = vadd.xlane.f32.xlu0 %v62
    %v64 = vpop.xlane.xlu0 %63
    %v65 = vmul.f32 %v61, %v52
    %v66 = vmul.f32 %v64, %v52
    %v67 = vadd.f32 %v65, 1e-06
    %v68 = vadd.f32 %v66, 1e-06
    %v69 = vrsqrt.pop %v67
    %v70 = vmul.f32 %v69, %v67
    %v71 = vmul.f32 %v70, %v69
    %v72 = vmul.f32 0.5, %v71
    %v73 = vsub.f32 1.5, %v72
    %v74 = vmul.f32 %v69, %v73
    %vm75 = vweird.f32 %v67
    %vm76 = vweird.f32 %v69
    %vm77 = vmor %vm75, %vm76
    %v78 = vsel %vm77, %v69, %v74
    %v79 = vrsqrt.pop %v68
    %v80 = vmul.f32 %v79, %v68
    %v81 = vmul.f32 %v80, %v79
    %v82 = vmul.f32 0.5, %v81
    %v83 = vsub.f32 1.5, %v82
    %v84 = vmul.f32 %v79, %v83
    %vm85 = vweird.f32 %v68
    %vm86 = vweird.f32 %v79
    %vm87 = vmor %vm85, %vm86
    %v88 = vsel %vm87, %v79, %v84
    %v89 = vmul.f32 %v55, %v78
    %v90 = vmul.f32 %v56, %v88
    %v91 = vld [vmem:[%s7] sm:$0x1]
    %v93 = vperm.slane %v91, 0
    %v95 = vmul.f32 %v89, %v93
    %v96 = vmul.f32 %v90, %v93
    %v97 = vld [vmem:[%s8] sm:$0x1]
    %v99 = vperm.slane %v97, 0
    %v101 = vadd.f32 %v95, %v99
    %v102 = vadd.f32 %v96, %v99
    %v103 = vpack.c.bf16 %v101, %v101
    %v104 = vpack.c.bf16 %v102, %v102
    %v105 = vld [vmem:[%s3] sm:$0xf]
    %v106 = vld [vmem:[%s3 + $0x4] sm:$0xf]
    %v107 = vld [vmem:[%s3 + $0x8] sm:$0xf]
    %v108 = vld [vmem:[%s3 + $0xc] sm:$0xf]
    %v109 = vld [vmem:[%s3 + $0x10] sm:$0xf]
    %v110 = vld [vmem:[%s3 + $0x14] sm:$0xf]
    %v111 = vld [vmem:[%s3 + $0x18] sm:$0xf]
    %v112 = vld [vmem:[%s3 + $0x1c] sm:$0xf]
    %v113 = vld [vmem:[%s3 + $0x20] sm:$0xf]
    %v114 = vld [vmem:[%s3 + $0x24] sm:$0xf]
    %v115 = vld [vmem:[%s3 + $0x28] sm:$0xf]
    %v116 = vld [vmem:[%s3 + $0x2c] sm:$0xf]
    %v117 = vld [vmem:[%s3 + $0x30] sm:$0xf]
    %v118 = vld [vmem:[%s3 + $0x34] sm:$0xf]
    %v119 = vld [vmem:[%s3 + $0x38] sm:$0xf]
    %v120 = vld [vmem:[%s3 + $0x3c] sm:$0xf]
    %v121 = vld [vmem:[%s4] sm:$0xf]
    %v122 = vld [vmem:[%s4 + $0x4] sm:$0xf]
    %v123 = vld [vmem:[%s4 + $0x8] sm:$0xf]
    %v124 = vld [vmem:[%s4 + $0xc] sm:$0xf]
    %v125 = vld [vmem:[%s4 + $0x10] sm:$0xf]
    %v126 = vld [vmem:[%s4 + $0x14] sm:$0xf]
    %v127 = vld [vmem:[%s4 + $0x18] sm:$0xf]
    %v128 = vld [vmem:[%s4 + $0x1c] sm:$0xf]
    %v129 = vld [vmem:[%s4 + $0x20] sm:$0xf]
    %v130 = vld [vmem:[%s4 + $0x24] sm:$0xf]
    %v131 = vld [vmem:[%s4 + $0x28] sm:$0xf]
    %v132 = vld [vmem:[%s4 + $0x2c] sm:$0xf]
    %v133 = vld [vmem:[%s4 + $0x30] sm:$0xf]
    %v134 = vld [vmem:[%s4 + $0x34] sm:$0xf]
    %v135 = vld [vmem:[%s4 + $0x38] sm:$0xf]
    %v136 = vld [vmem:[%s4 + $0x3c] sm:$0xf]
    %v137 = vld [vmem:[%s5] sm:$0xf]
    %v138 = vld [vmem:[%s5 + $0x4] sm:$0xf]
    %v139 = vld [vmem:[%s5 + $0x8] sm:$0xf]
    %v140 = vld [vmem:[%s5 + $0xc] sm:$0xf]
    %v141 = vld [vmem:[%s5 + $0x10] sm:$0xf]
    %v142 = vld [vmem:[%s5 + $0x14] sm:$0xf]
    %v143 = vld [vmem:[%s5 + $0x18] sm:$0xf]
    %v144 = vld [vmem:[%s5 + $0x1c] sm:$0xf]
    %v145 = vld [vmem:[%s5 + $0x20] sm:$0xf]
    %v146 = vld [vmem:[%s5 + $0x24] sm:$0xf]
    %v147 = vld [vmem:[%s5 + $0x28] sm:$0xf]
    %v148 = vld [vmem:[%s5 + $0x2c] sm:$0xf]
    %v149 = vld [vmem:[%s5 + $0x30] sm:$0xf]
    %v150 = vld [vmem:[%s5 + $0x34] sm:$0xf]
    %v151 = vld [vmem:[%s5 + $0x38] sm:$0xf]
    %v152 = vld [vmem:[%s5 + $0x3c] sm:$0xf]
    %v153 = vld [vmem:[%s6] sm:$0xf]
    %v154 = vld [vmem:[%s6 + $0x4] sm:$0xf]
    %v155 = vld [vmem:[%s6 + $0x8] sm:$0xf]
    %v156 = vld [vmem:[%s6 + $0xc] sm:$0xf]
    %v157 = vld [vmem:[%s1] sm:$0xf]
    %v158 = vld [vmem:[%s2] sm:$0xf]
    %v163 = vunpack.c.l.b16 %v105
    %v164 = vunpack.c.l.b16 %v106
    %v165 = vunpack.c.l.b16 %v107
    %v166 = vunpack.c.l.b16 %v108
    %v167 = vpack.c.b16 %v164, %v163
    %v168 = vpack.c.b16 %v166, %v165
    %v172 = vsel %vm39, %v103, 0
    %174 = vmatpush.bf16.msra.mxu0 0
    %175 = vmatpush.bf16.msra.mxu0 0
    %176 = vmatpush.bf16.msra.mxu0 0
    %177 = vmatpush.bf16.msra.mxu0 0
    %178 = vmatpush.bf16.msra.mxu0 0
    %179 = vmatpush.bf16.msra.mxu0 0
    %180 = vmatpush.bf16.msra.mxu0 %v168
    %181 = vmatpush.bf16.msra.mxu0 %v167
    %182 = vmatmul.bf16.gmra.mxu0 %v172
    %v183 = vpop.f32.mrf.mxu0
    %v184 = vadd.f32 0.0, %v183
    %v185 = vpop.f32.mrf.mxu0
    %186 = vdwg.mxu0
    %v191 = vunpack.c.l.b16 %v109
    %v192 = vunpack.c.l.b16 %v110
    %v193 = vunpack.c.l.b16 %v111
    %v194 = vunpack.c.l.b16 %v112
    %v195 = vpack.c.b16 %v192, %v191
    %v196 = vpack.c.b16 %v194, %v193
    %199 = vmatpush.bf16.msra.mxu0 0
    %200 = vmatpush.bf16.msra.mxu0 0
    %201 = vmatpush.bf16.msra.mxu0 0
    %202 = vmatpush.bf16.msra.mxu0 0
    %203 = vmatpush.bf16.msra.mxu0 0
    %204 = vmatpush.bf16.msra.mxu0 0
    %205 = vmatpush.bf16.msra.mxu0 %v196
    %206 = vmatpush.bf16.msra.mxu0 %v195
    %207 = vmatmul.bf16.gmra.mxu0 %v172
    %v208 = vpop.f32.mrf.mxu0
    %v209 = vadd.f32 0.0, %v208
    %v210 = vpop.f32.mrf.mxu0
    %211 = vdwg.mxu0
    %v216 = vunpack.c.l.b16 %v113
    %v217 = vunpack.c.l.b16 %v114
    %v218 = vunpack.c.l.b16 %v115
    %v219 = vunpack.c.l.b16 %v116
    %v220 = vpack.c.b16 %v217, %v216
    %v221 = vpack.c.b16 %v219, %v218
    %224 = vmatpush.bf16.msra.mxu0 0
    %225 = vmatpush.bf16.msra.mxu0 0
    %226 = vmatpush.bf16.msra.mxu0 0
    %227 = vmatpush.bf16.msra.mxu0 0
    %228 = vmatpush.bf16.msra.mxu0 0
    %229 = vmatpush.bf16.msra.mxu0 0
    %230 = vmatpush.bf16.msra.mxu0 %v221
    %231 = vmatpush.bf16.msra.mxu0 %v220
    %232 = vmatmul.bf16.gmra.mxu0 %v172
    %v233 = vpop.f32.mrf.mxu0
    %v234 = vadd.f32 0.0, %v233
    %v235 = vpop.f32.mrf.mxu0
    %236 = vdwg.mxu0
    %v241 = vunpack.c.l.b16 %v117
    %v242 = vunpack.c.l.b16 %v118
    %v243 = vunpack.c.l.b16 %v119
    %v244 = vunpack.c.l.b16 %v120
    %v245 = vpack.c.b16 %v242, %v241
    %v246 = vpack.c.b16 %v244, %v243
    %249 = vmatpush.bf16.msra.mxu0 0
    %250 = vmatpush.bf16.msra.mxu0 0
    %251 = vmatpush.bf16.msra.mxu0 0
    %252 = vmatpush.bf16.msra.mxu0 0
    %253 = vmatpush.bf16.msra.mxu0 0
    %254 = vmatpush.bf16.msra.mxu0 0
    %255 = vmatpush.bf16.msra.mxu0 %v246
    %256 = vmatpush.bf16.msra.mxu0 %v245
    %257 = vmatmul.bf16.gmra.mxu0 %v172
    %v258 = vpop.f32.mrf.mxu0
    %v259 = vadd.f32 0.0, %v258
    %v260 = vpop.f32.mrf.mxu0
    %261 = vdwg.mxu0
    %v266 = vunpack.c.l.b16 %v121
    %v267 = vunpack.c.l.b16 %v122
    %v268 = vunpack.c.l.b16 %v123
    %v269 = vunpack.c.l.b16 %v124
    %v270 = vpack.c.b16 %v267, %v266
    %v271 = vpack.c.b16 %v269, %v268
    %v275 = vsel %vm39, %v157, 0
    %277 = vmatpush.bf16.msra.mxu0 0
    %278 = vmatpush.bf16.msra.mxu0 0
    %279 = vmatpush.bf16.msra.mxu0 0
    %280 = vmatpush.bf16.msra.mxu0 0
    %281 = vmatpush.bf16.msra.mxu0 0
    %282 = vmatpush.bf16.msra.mxu0 0
    %283 = vmatpush.bf16.msra.mxu0 %v271
    %284 = vmatpush.bf16.msra.mxu0 %v270
    %285 = vmatmul.bf16.gmra.mxu0 %v275
    %v286 = vpop.f32.mrf.mxu0
    %v287 = vadd.f32 0.0, %v286
    %v288 = vpop.f32.mrf.mxu0
    %289 = vdwg.mxu0
    %v294 = vunpack.c.l.b16 %v125
    %v295 = vunpack.c.l.b16 %v126
    %v296 = vunpack.c.l.b16 %v127
    %v297 = vunpack.c.l.b16 %v128
    %v298 = vpack.c.b16 %v295, %v294
    %v299 = vpack.c.b16 %v297, %v296
    %302 = vmatpush.bf16.msra.mxu0 0
    %303 = vmatpush.bf16.msra.mxu0 0
    %304 = vmatpush.bf16.msra.mxu0 0
    %305 = vmatpush.bf16.msra.mxu0 0
    %306 = vmatpush.bf16.msra.mxu0 0
    %307 = vmatpush.bf16.msra.mxu0 0
    %308 = vmatpush.bf16.msra.mxu0 %v299
    %309 = vmatpush.bf16.msra.mxu0 %v298
    %310 = vmatmul.bf16.gmra.mxu0 %v275
    %v311 = vpop.f32.mrf.mxu0
    %v312 = vadd.f32 0.0, %v311
    %v313 = vpop.f32.mrf.mxu0
    %314 = vdwg.mxu0
    %v319 = vunpack.c.l.b16 %v129
    %v320 = vunpack.c.l.b16 %v130
    %v321 = vunpack.c.l.b16 %v131
    %v322 = vunpack.c.l.b16 %v132
    %v323 = vpack.c.b16 %v320, %v319
    %v324 = vpack.c.b16 %v322, %v321
    %327 = vmatpush.bf16.msra.mxu0 0
    %328 = vmatpush.bf16.msra.mxu0 0
    %329 = vmatpush.bf16.msra.mxu0 0
    %330 = vmatpush.bf16.msra.mxu0 0
    %331 = vmatpush.bf16.msra.mxu0 0
    %332 = vmatpush.bf16.msra.mxu0 0
    %333 = vmatpush.bf16.msra.mxu0 %v324
    %334 = vmatpush.bf16.msra.mxu0 %v323
    %335 = vmatmul.bf16.gmra.mxu0 %v275
    %v336 = vpop.f32.mrf.mxu0
    %v337 = vadd.f32 0.0, %v336
    %v338 = vpop.f32.mrf.mxu0
    %339 = vdwg.mxu0
    %v344 = vunpack.c.l.b16 %v133
    %v345 = vunpack.c.l.b16 %v134
    %v346 = vunpack.c.l.b16 %v135
    %v347 = vunpack.c.l.b16 %v136
    %v348 = vpack.c.b16 %v345, %v344
    %v349 = vpack.c.b16 %v347, %v346
    %352 = vmatpush.bf16.msra.mxu0 0
    %353 = vmatpush.bf16.msra.mxu0 0
    %354 = vmatpush.bf16.msra.mxu0 0
    %355 = vmatpush.bf16.msra.mxu0 0
    %356 = vmatpush.bf16.msra.mxu0 0
    %357 = vmatpush.bf16.msra.mxu0 0
    %358 = vmatpush.bf16.msra.mxu0 %v349
    %359 = vmatpush.bf16.msra.mxu0 %v348
    %360 = vmatmul.bf16.gmra.mxu0 %v275
    %v361 = vpop.f32.mrf.mxu0
    %v362 = vadd.f32 0.0, %v361
    %v363 = vpop.f32.mrf.mxu0
    %364 = vdwg.mxu0
    %v369 = vunpack.c.l.b16 %v137
    %v370 = vunpack.c.l.b16 %v138
    %v371 = vunpack.c.l.b16 %v139
    %v372 = vunpack.c.l.b16 %v140
    %v373 = vpack.c.b16 %v370, %v369
    %v374 = vpack.c.b16 %v372, %v371
    %v378 = vsel %vm39, %v158, 0
    %380 = vmatpush.bf16.msra.mxu0 0
    %381 = vmatpush.bf16.msra.mxu0 0
    %382 = vmatpush.bf16.msra.mxu0 0
    %383 = vmatpush.bf16.msra.mxu0 0
    %384 = vmatpush.bf16.msra.mxu0 0
    %385 = vmatpush.bf16.msra.mxu0 0
    %386 = vmatpush.bf16.msra.mxu0 %v374
    %387 = vmatpush.bf16.msra.mxu0 %v373
    %388 = vmatmul.bf16.gmra.mxu0 %v378
    %v389 = vpop.f32.mrf.mxu0
    %v390 = vadd.f32 0.0, %v389
    %v391 = vpop.f32.mrf.mxu0
    %392 = vdwg.mxu0
    %v397 = vunpack.c.l.b16 %v141
    %v398 = vunpack.c.l.b16 %v142
    %v399 = vunpack.c.l.b16 %v143
    %v400 = vunpack.c.l.b16 %v144
    %v401 = vpack.c.b16 %v398, %v397
    %v402 = vpack.c.b16 %v400, %v399
    %405 = vmatpush.bf16.msra.mxu0 0
    %406 = vmatpush.bf16.msra.mxu0 0
    %407 = vmatpush.bf16.msra.mxu0 0
    %408 = vmatpush.bf16.msra.mxu0 0
    %409 = vmatpush.bf16.msra.mxu0 0
    %410 = vmatpush.bf16.msra.mxu0 0
    %411 = vmatpush.bf16.msra.mxu0 %v402
    %412 = vmatpush.bf16.msra.mxu0 %v401
    %413 = vmatmul.bf16.gmra.mxu0 %v378
    %v414 = vpop.f32.mrf.mxu0
    %v415 = vadd.f32 0.0, %v414
    %v416 = vpop.f32.mrf.mxu0
    %417 = vdwg.mxu0
    %v422 = vunpack.c.l.b16 %v145
    %v423 = vunpack.c.l.b16 %v146
    %v424 = vunpack.c.l.b16 %v147
    %v425 = vunpack.c.l.b16 %v148
    %v426 = vpack.c.b16 %v423, %v422
    %v427 = vpack.c.b16 %v425, %v424
    %430 = vmatpush.bf16.msra.mxu0 0
    %431 = vmatpush.bf16.msra.mxu0 0
    %432 = vmatpush.bf16.msra.mxu0 0
    %433 = vmatpush.bf16.msra.mxu0 0
    %434 = vmatpush.bf16.msra.mxu0 0
    %435 = vmatpush.bf16.msra.mxu0 0
    %436 = vmatpush.bf16.msra.mxu0 %v427
    %437 = vmatpush.bf16.msra.mxu0 %v426
    %438 = vmatmul.bf16.gmra.mxu0 %v378
    %v439 = vpop.f32.mrf.mxu0
    %v440 = vadd.f32 0.0, %v439
    %v441 = vpop.f32.mrf.mxu0
    %442 = vdwg.mxu0
    %v447 = vunpack.c.l.b16 %v149
    %v448 = vunpack.c.l.b16 %v150
    %v449 = vunpack.c.l.b16 %v151
    %v450 = vunpack.c.l.b16 %v152
    %v451 = vpack.c.b16 %v448, %v447
    %v452 = vpack.c.b16 %v450, %v449
    %455 = vmatpush.bf16.msra.mxu0 0
    %456 = vmatpush.bf16.msra.mxu0 0
    %457 = vmatpush.bf16.msra.mxu0 0
    %458 = vmatpush.bf16.msra.mxu0 0
    %459 = vmatpush.bf16.msra.mxu0 0
    %460 = vmatpush.bf16.msra.mxu0 0
    %461 = vmatpush.bf16.msra.mxu0 %v452
    %462 = vmatpush.bf16.msra.mxu0 %v451
    %463 = vmatmul.bf16.gmra.mxu0 %v378
    %v464 = vpop.f32.mrf.mxu0
    %v465 = vadd.f32 0.0, %v464
    %v466 = vpop.f32.mrf.mxu0
    %467 = vdwg.mxu0
    %v468 = vpack.c.bf16 %v184, %v184
    %v469 = vpack.c.bf16 %v209, %v209
    %v470 = vpack.c.bf16 %v234, %v234
    %v471 = vpack.c.bf16 %v259, %v259
    %v472 = vpack.c.bf16 %v287, %v287
    %v473 = vpack.c.bf16 %v312, %v312
    %v474 = vpack.c.bf16 %v337, %v337
    %v475 = vpack.c.bf16 %v362, %v362
    %vm476 = vcmask 64512
    %v478 = vsel %vm476, %v468, 0
    %v481 = vsel %vm476, %v472, 0
    %483 = vmatpush.bf16.xpose.msra.mxu0 0
    %484 = vmatpush.bf16.xpose.msra.mxu0 0
    %485 = vmatpush.bf16.xpose.msra.mxu0 0
    %486 = vmatpush.bf16.xpose.msra.mxu0 0
    %487 = vmatpush.bf16.xpose.msra.mxu0 0
    %488 = vmatpush.bf16.xpose.msra.mxu0 0
    %489 = vmatpush.bf16.xpose.msra.mxu0 0
    %490 = vmatpush.bf16.xpose.msra.mxu0 %v481
    %491 = vmatmul.bf16.gmra.mxu0 %v478
    %v492 = vpop.f32.mrf.mxu0
    %v493 = vadd.f32 0.0, %v492
    %v494 = vpop.f32.mrf.mxu0
    %495 = vdwg.mxu0
    %v497 = vsel %vm476, %v469, 0
    %v500 = vsel %vm476, %v473, 0
    %502 = vmatpush.bf16.xpose.msra.mxu0 0
    %503 = vmatpush.bf16.xpose.msra.mxu0 0
    %504 = vmatpush.bf16.xpose.msra.mxu0 0
    %505 = vmatpush.bf16.xpose.msra.mxu0 0
    %506 = vmatpush.bf16.xpose.msra.mxu0 0
    %507 = vmatpush.bf16.xpose.msra.mxu0 0
    %508 = vmatpush.bf16.xpose.msra.mxu0 0
    %509 = vmatpush.bf16.xpose.msra.mxu0 %v500
    %510 = vmatmul.bf16.gmra.mxu0 %v497
    %v511 = vpop.f32.mrf.mxu0
    %v512 = vadd.f32 0.0, %v511
    %v513 = vpop.f32.mrf.mxu0
    %514 = vdwg.mxu0
    %v516 = vsel %vm476, %v470, 0
    %v519 = vsel %vm476, %v474, 0
    %521 = vmatpush.bf16.xpose.msra.mxu0 0
    %522 = vmatpush.bf16.xpose.msra.mxu0 0
    %523 = vmatpush.bf16.xpose.msra.mxu0 0
    %524 = vmatpush.bf16.xpose.msra.mxu0 0
    %525 = vmatpush.bf16.xpose.msra.mxu0 0
    %526 = vmatpush.bf16.xpose.msra.mxu0 0
    %527 = vmatpush.bf16.xpose.msra.mxu0 0
    %528 = vmatpush.bf16.xpose.msra.mxu0 %v519
    %529 = vmatmul.bf16.gmra.mxu0 %v516
    %v530 = vpop.f32.mrf.mxu0
    %v531 = vadd.f32 0.0, %v530
    %v532 = vpop.f32.mrf.mxu0
    %533 = vdwg.mxu0
    %v535 = vsel %vm476, %v471, 0
    %v538 = vsel %vm476, %v475, 0
    %540 = vmatpush.bf16.xpose.msra.mxu0 0
    %541 = vmatpush.bf16.xpose.msra.mxu0 0
    %542 = vmatpush.bf16.xpose.msra.mxu0 0
    %543 = vmatpush.bf16.xpose.msra.mxu0 0
    %544 = vmatpush.bf16.xpose.msra.mxu0 0
    %545 = vmatpush.bf16.xpose.msra.mxu0 0
    %546 = vmatpush.bf16.xpose.msra.mxu0 0
    %547 = vmatpush.bf16.xpose.msra.mxu0 %v538
    %548 = vmatmul.bf16.gmra.mxu0 %v535
    %v549 = vpop.f32.mrf.mxu0
    %v550 = vadd.f32 0.0, %v549
    %v551 = vpop.f32.mrf.mxu0
    %552 = vdwg.mxu0
    %v553 = vsel %vm476, %v493, -inf
    %554 = vmax.xlane.f32.xlu0 %v553
    %v555 = vpop.xlane.xlu0 %554
    %v556 = vsel %vm476, %v512, -inf
    %557 = vmax.xlane.f32.xlu0 %v556
    %v558 = vpop.xlane.xlu0 %557
    %v559 = vsel %vm476, %v531, -inf
    %560 = vmax.xlane.f32.xlu0 %v559
    %v561 = vpop.xlane.xlu0 %560
    %v562 = vsel %vm476, %v550, -inf
    %563 = vmax.xlane.f32.xlu0 %v562
    %v564 = vpop.xlane.xlu0 %563
    %v565 = vsub.f32 %v493, %v555
    %v566 = vsub.f32 %v512, %v558
    %v567 = vsub.f32 %v531, %v561
    %v568 = vsub.f32 %v550, %v564
    %v569 = vmul.f32 %v565, 1.442695
    %v570 = vpow.pop %v569
    %v571 = vmul.f32 %v566, 1.442695
    %v572 = vpow.pop %v571
    %v573 = vmul.f32 %v567, 1.442695
    %v574 = vpow.pop %v573
    %v575 = vmul.f32 %v568, 1.442695
    %v576 = vpow.pop %v575
    %v577 = vsel %vm476, %v570, 0.0
    %578 = vadd.xlane.f32.xlu0 %v577
    %v579 = vpop.xlane.xlu0 %578
    %v580 = vsel %vm476, %v572, 0.0
    %581 = vadd.xlane.f32.xlu0 %v580
    %v582 = vpop.xlane.xlu0 %581
    %v583 = vsel %vm476, %v574, 0.0
    %584 = vadd.xlane.f32.xlu0 %v583
    %v585 = vpop.xlane.xlu0 %584
    %v586 = vsel %vm476, %v576, 0.0
    %587 = vadd.xlane.f32.xlu0 %v586
    %v588 = vpop.xlane.xlu0 %587
    %v589 = vrcp.pop %v579
    %v590 = vrcp.pop %v582
    %v591 = vrcp.pop %v585
    %v592 = vrcp.pop %v588
    %v593 = vmul.f32 %v570, %v589
    %v594 = vmul.f32 %v572, %v590
    %v595 = vmul.f32 %v574, %v591
    %v596 = vmul.f32 %v576, %v592
    %597 = vst.msk [vmem:[#allocation4] sm:$0xff] %vm476, %v593
    %598 = vst.msk [vmem:[#allocation4 + $0x8] sm:$0xff] %vm476, %v594
    %599 = vst.msk [vmem:[#allocation4 + $0x10] sm:$0xff] %vm476, %v595
    %600 = vst.msk [vmem:[#allocation4 + $0x18] sm:$0xff] %vm476, %v596
    %v601 = vpack.c.bf16 %v593, %v593
    %v602 = vpack.c.bf16 %v594, %v594
    %v603 = vpack.c.bf16 %v595, %v595
    %v604 = vpack.c.bf16 %v596, %v596
    %v605 = vpack.c.bf16 %v390, %v390
    %v606 = vpack.c.bf16 %v415, %v415
    %v607 = vpack.c.bf16 %v440, %v440
    %v608 = vpack.c.bf16 %v465, %v465
    %v610 = vsel %vm476, %v601, 0
    %vm612 = vcmask 1043456
    %v614 = vsel %vm612, %v605, 0
    %616 = vmatpush.bf16.msra.mxu0 0
    %617 = vmatpush.bf16.msra.mxu0 0
    %618 = vmatpush.bf16.msra.mxu0 0
    %619 = vmatpush.bf16.msra.mxu0 0
    %620 = vmatpush.bf16.msra.mxu0 0
    %621 = vmatpush.bf16.msra.mxu0 0
    %622 = vmatpush.bf16.msra.mxu0 0
    %623 = vmatpush.bf16.msra.mxu0 %v614
    %624 = vmatmul.bf16.gmra.mxu0 %v610
    %v625 = vpop.f32.mrf.mxu0
    %v626 = vadd.f32 0.0, %v625
    %v627 = vpop.f32.mrf.mxu0
    %628 = vdwg.mxu0
    %v630 = vsel %vm476, %v602, 0
    %v633 = vsel %vm612, %v606, 0
    %635 = vmatpush.bf16.msra.mxu0 0
    %636 = vmatpush.bf16.msra.mxu0 0
    %637 = vmatpush.bf16.msra.mxu0 0
    %638 = vmatpush.bf16.msra.mxu0 0
    %639 = vmatpush.bf16.msra.mxu0 0
    %640 = vmatpush.bf16.msra.mxu0 0
    %641 = vmatpush.bf16.msra.mxu0 0
    %642 = vmatpush.bf16.msra.mxu0 %v633
    %643 = vmatmul.bf16.gmra.mxu0 %v630
    %v644 = vpop.f32.mrf.mxu0
    %v645 = vadd.f32 0.0, %v644
    %v646 = vpop.f32.mrf.mxu0
    %647 = vdwg.mxu0
    %v649 = vsel %vm476, %v603, 0
    %v652 = vsel %vm612, %v607, 0
    %654 = vmatpush.bf16.msra.mxu0 0
    %655 = vmatpush.bf16.msra.mxu0 0
    %656 = vmatpush.bf16.msra.mxu0 0
    %657 = vmatpush.bf16.msra.mxu0 0
    %658 = vmatpush.bf16.msra.mxu0 0
    %659 = vmatpush.bf16.msra.mxu0 0
    %660 = vmatpush.bf16.msra.mxu0 0
    %661 = vmatpush.bf16.msra.mxu0 %v652
    %662 = vmatmul.bf16.gmra.mxu0 %v649
    %v663 = vpop.f32.mrf.mxu0
    %v664 = vadd.f32 0.0, %v663
    %v665 = vpop.f32.mrf.mxu0
    %666 = vdwg.mxu0
    %v668 = vsel %vm476, %v604, 0
    %v671 = vsel %vm612, %v608, 0
    %673 = vmatpush.bf16.msra.mxu0 0
    %674 = vmatpush.bf16.msra.mxu0 0
    %675 = vmatpush.bf16.msra.mxu0 0
    %676 = vmatpush.bf16.msra.mxu0 0
    %677 = vmatpush.bf16.msra.mxu0 0
    %678 = vmatpush.bf16.msra.mxu0 0
    %679 = vmatpush.bf16.msra.mxu0 0
    %680 = vmatpush.bf16.msra.mxu0 %v671
    %681 = vmatmul.bf16.gmra.mxu0 %v668
    %v682 = vpop.f32.mrf.mxu0
    %v683 = vadd.f32 0.0, %v682
    %v684 = vpop.f32.mrf.mxu0
    %685 = vdwg.mxu0
    %v686 = vpack.c.bf16 %v626, %v626
    %v687 = vpack.c.bf16 %v645, %v645
    %v688 = vpack.c.bf16 %v664, %v664
    %v689 = vpack.c.bf16 %v683, %v683
    %v691 = vsel %vm476, %v686, 0
    %v694 = vsel %vm612, %v153, 0
    %696 = vmatpush.bf16.msra.mxu0 0
    %697 = vmatpush.bf16.msra.mxu0 0
    %698 = vmatpush.bf16.msra.mxu0 0
    %699 = vmatpush.bf16.msra.mxu0 0
    %700 = vmatpush.bf16.msra.mxu0 0
    %701 = vmatpush.bf16.msra.mxu0 0
    %702 = vmatpush.bf16.msra.mxu0 0
    %703 = vmatpush.bf16.msra.mxu0 %v694
    %704 = vmatmul.bf16.gmra.mxu0 %v691
    %v705 = vpop.f32.mrf.mxu0
    %v706 = vadd.f32 0.0, %v705
    %v707 = vpop.f32.mrf.mxu0
    %708 = vdwg.mxu0
    %v710 = vsel %vm476, %v687, 0
    %v713 = vsel %vm612, %v154, 0
    %715 = vmatpush.bf16.msra.mxu0 0
    %716 = vmatpush.bf16.msra.mxu0 0
    %717 = vmatpush.bf16.msra.mxu0 0
    %718 = vmatpush.bf16.msra.mxu0 0
    %719 = vmatpush.bf16.msra.mxu0 0
    %720 = vmatpush.bf16.msra.mxu0 0
    %721 = vmatpush.bf16.msra.mxu0 0
    %722 = vmatpush.bf16.msra.mxu0 %v713
    %723 = vmatmul.bf16.gmra.mxu0 %v710
    %v724 = vpop.f32.mrf.mxu0
    %v725 = vadd.f32 0.0, %v724
    %v726 = vpop.f32.mrf.mxu0
    %727 = vdwg.mxu0
    %v729 = vsel %vm476, %v688, 0
    %v732 = vsel %vm612, %v155, 0
    %734 = vmatpush.bf16.msra.mxu0 0
    %735 = vmatpush.bf16.msra.mxu0 0
    %736 = vmatpush.bf16.msra.mxu0 0
    %737 = vmatpush.bf16.msra.mxu0 0
    %738 = vmatpush.bf16.msra.mxu0 0
    %739 = vmatpush.bf16.msra.mxu0 0
    %740 = vmatpush.bf16.msra.mxu0 0
    %741 = vmatpush.bf16.msra.mxu0 %v732
    %742 = vmatmul.bf16.gmra.mxu0 %v729
    %v743 = vpop.f32.mrf.mxu0
    %v744 = vadd.f32 0.0, %v743
    %v745 = vpop.f32.mrf.mxu0
    %746 = vdwg.mxu0
    %v748 = vsel %vm476, %v689, 0
    %v751 = vsel %vm612, %v156, 0
    %753 = vmatpush.bf16.msra.mxu0 0
    %754 = vmatpush.bf16.msra.mxu0 0
    %755 = vmatpush.bf16.msra.mxu0 0
    %756 = vmatpush.bf16.msra.mxu0 0
    %757 = vmatpush.bf16.msra.mxu0 0
    %758 = vmatpush.bf16.msra.mxu0 0
    %759 = vmatpush.bf16.msra.mxu0 0
    %760 = vmatpush.bf16.msra.mxu0 %v751
    %761 = vmatmul.bf16.gmra.mxu0 %v748
    %v762 = vpop.f32.mrf.mxu0
    %v763 = vadd.f32 0.0, %v762
    %v764 = vpop.f32.mrf.mxu0
    %765 = vdwg.mxu0
    %v766 = vsel %vm39, %v706, 0.0
    %v767 = vsel %vm39, %v725, 0.0
    %v768 = vadd.f32 %v766, %v767
    %v769 = vsel %vm39, %v744, 0.0
    %v770 = vadd.f32 %v768, %v769
    %v771 = vsel %vm39, %v763, 0.0
    %v772 = vadd.f32 %v770, %v771
    %v773 = vadd.f32 %v772, %v37
    %774 = vst.msk [vmem:[#allocation2] sm:$0xff] %vm39, %v773
    %s775 = scalar_lea.vmem %s1, 4
    %v776 = vld [vmem:[%s775] sm:$0xf]
    %s777 = scalar_lea.vmem %s2, 4
    %v778 = vld [vmem:[%s777] sm:$0xf]
    %v780 = vsel %vm39, %v104, 0
    %782 = vmatpush.bf16.msra.mxu0 0
    %783 = vmatpush.bf16.msra.mxu0 0
    %784 = vmatpush.bf16.msra.mxu0 0
    %785 = vmatpush.bf16.msra.mxu0 0
    %786 = vmatpush.bf16.msra.mxu0 0
    %787 = vmatpush.bf16.msra.mxu0 0
    %788 = vmatpush.bf16.msra.mxu0 %v168
    %789 = vmatpush.bf16.msra.mxu0 %v167
    %790 = vmatmul.bf16.gmra.mxu0 %v780
    %v791 = vpop.f32.mrf.mxu0
    %v792 = vadd.f32 0.0, %v791
    %v793 = vpop.f32.mrf.mxu0
    %794 = vdwg.mxu0
    %795 = vmatpush.bf16.msra.mxu0 0
    %796 = vmatpush.bf16.msra.mxu0 0
    %797 = vmatpush.bf16.msra.mxu0 0
    %798 = vmatpush.bf16.msra.mxu0 0
    %799 = vmatpush.bf16.msra.mxu0 0
    %800 = vmatpush.bf16.msra.mxu0 0
    %801 = vmatpush.bf16.msra.mxu0 %v196
    %802 = vmatpush.bf16.msra.mxu0 %v195
    %803 = vmatmul.bf16.gmra.mxu0 %v780
    %v804 = vpop.f32.mrf.mxu0
    %v805 = vadd.f32 0.0, %v804
    %v806 = vpop.f32.mrf.mxu0
    %807 = vdwg.mxu0
    %808 = vmatpush.bf16.msra.mxu0 0
    %809 = vmatpush.bf16.msra.mxu0 0
    %810 = vmatpush.bf16.msra.mxu0 0
    %811 = vmatpush.bf16.msra.mxu0 0
    %812 = vmatpush.bf16.msra.mxu0 0
    %813 = vmatpush.bf16.msra.mxu0 0
    %814 = vmatpush.bf16.msra.mxu0 %v221
    %815 = vmatpush.bf16.msra.mxu0 %v220
    %816 = vmatmul.bf16.gmra.mxu0 %v780
    %v817 = vpop.f32.mrf.mxu0
    %v818 = vadd.f32 0.0, %v817
    %v819 = vpop.f32.mrf.mxu0
    %820 = vdwg.mxu0
    %821 = vmatpush.bf16.msra.mxu0 0
    %822 = vmatpush.bf16.msra.mxu0 0
    %823 = vmatpush.bf16.msra.mxu0 0
    %824 = vmatpush.bf16.msra.mxu0 0
    %825 = vmatpush.bf16.msra.mxu0 0
    %826 = vmatpush.bf16.msra.mxu0 0
    %827 = vmatpush.bf16.msra.mxu0 %v246
    %828 = vmatpush.bf16.msra.mxu0 %v245
    %829 = vmatmul.bf16.gmra.mxu0 %v780
    %v830 = vpop.f32.mrf.mxu0
    %v831 = vadd.f32 0.0, %v830
    %v832 = vpop.f32.mrf.mxu0
    %833 = vdwg.mxu0
    %v835 = vsel %vm39, %v776, 0
    %837 = vmatpush.bf16.msra.mxu0 0
    %838 = vmatpush.bf16.msra.mxu0 0
    %839 = vmatpush.bf16.msra.mxu0 0
    %840 = vmatpush.bf16.msra.mxu0 0
    %841 = vmatpush.bf16.msra.mxu0 0
    %842 = vmatpush.bf16.msra.mxu0 0
    %843 = vmatpush.bf16.msra.mxu0 %v271
    %844 = vmatpush.bf16.msra.mxu0 %v270
    %845 = vmatmul.bf16.gmra.mxu0 %v835
    %v846 = vpop.f32.mrf.mxu0
    %v847 = vadd.f32 0.0, %v846
    %v848 = vpop.f32.mrf.mxu0
    %849 = vdwg.mxu0
    %850 = vmatpush.bf16.msra.mxu0 0
    %851 = vmatpush.bf16.msra.mxu0 0
    %852 = vmatpush.bf16.msra.mxu0 0
    %853 = vmatpush.bf16.msra.mxu0 0
    %854 = vmatpush.bf16.msra.mxu0 0
    %855 = vmatpush.bf16.msra.mxu0 0
    %856 = vmatpush.bf16.msra.mxu0 %v299
    %857 = vmatpush.bf16.msra.mxu0 %v298
    %858 = vmatmul.bf16.gmra.mxu0 %v835
    %v859 = vpop.f32.mrf.mxu0
    %v860 = vadd.f32 0.0, %v859
    %v861 = vpop.f32.mrf.mxu0
    %862 = vdwg.mxu0
    %863 = vmatpush.bf16.msra.mxu0 0
    %864 = vmatpush.bf16.msra.mxu0 0
    %865 = vmatpush.bf16.msra.mxu0 0
    %866 = vmatpush.bf16.msra.mxu0 0
    %867 = vmatpush.bf16.msra.mxu0 0
    %868 = vmatpush.bf16.msra.mxu0 0
    %869 = vmatpush.bf16.msra.mxu0 %v324
    %870 = vmatpush.bf16.msra.mxu0 %v323
    %871 = vmatmul.bf16.gmra.mxu0 %v835
    %v872 = vpop.f32.mrf.mxu0
    %v873 = vadd.f32 0.0, %v872
    %v874 = vpop.f32.mrf.mxu0
    %875 = vdwg.mxu0
    %876 = vmatpush.bf16.msra.mxu0 0
    %877 = vmatpush.bf16.msra.mxu0 0
    %878 = vmatpush.bf16.msra.mxu0 0
    %879 = vmatpush.bf16.msra.mxu0 0
    %880 = vmatpush.bf16.msra.mxu0 0
    %881 = vmatpush.bf16.msra.mxu0 0
    %882 = vmatpush.bf16.msra.mxu0 %v349
    %883 = vmatpush.bf16.msra.mxu0 %v348
    %884 = vmatmul.bf16.gmra.mxu0 %v835
    %v885 = vpop.f32.mrf.mxu0
    %v886 = vadd.f32 0.0, %v885
    %v887 = vpop.f32.mrf.mxu0
    %888 = vdwg.mxu0
    %v890 = vsel %vm39, %v778, 0
    %892 = vmatpush.bf16.msra.mxu0 0
    %893 = vmatpush.bf16.msra.mxu0 0
    %894 = vmatpush.bf16.msra.mxu0 0
    %895 = vmatpush.bf16.msra.mxu0 0
    %896 = vmatpush.bf16.msra.mxu0 0
    %897 = vmatpush.bf16.msra.mxu0 0
    %898 = vmatpush.bf16.msra.mxu0 %v374
    %899 = vmatpush.bf16.msra.mxu0 %v373
    %900 = vmatmul.bf16.gmra.mxu0 %v890
    %v901 = vpop.f32.mrf.mxu0
    %v902 = vadd.f32 0.0, %v901
    %v903 = vpop.f32.mrf.mxu0
    %904 = vdwg.mxu0
    %905 = vmatpush.bf16.msra.mxu0 0
    %906 = vmatpush.bf16.msra.mxu0 0
    %907 = vmatpush.bf16.msra.mxu0 0
    %908 = vmatpush.bf16.msra.mxu0 0
    %909 = vmatpush.bf16.msra.mxu0 0
    %910 = vmatpush.bf16.msra.mxu0 0
    %911 = vmatpush.bf16.msra.mxu0 %v402
    %912 = vmatpush.bf16.msra.mxu0 %v401
    %913 = vmatmul.bf16.gmra.mxu0 %v890
    %v914 = vpop.f32.mrf.mxu0
    %v915 = vadd.f32 0.0, %v914
    %v916 = vpop.f32.mrf.mxu0
    %917 = vdwg.mxu0
    %918 = vmatpush.bf16.msra.mxu0 0
    %919 = vmatpush.bf16.msra.mxu0 0
    %920 = vmatpush.bf16.msra.mxu0 0
    %921 = vmatpush.bf16.msra.mxu0 0
    %922 = vmatpush.bf16.msra.mxu0 0
    %923 = vmatpush.bf16.msra.mxu0 0
    %924 = vmatpush.bf16.msra.mxu0 %v427
    %925 = vmatpush.bf16.msra.mxu0 %v426
    %926 = vmatmul.bf16.gmra.mxu0 %v890
    %v927 = vpop.f32.mrf.mxu0
    %v928 = vadd.f32 0.0, %v927
    %v929 = vpop.f32.mrf.mxu0
    %930 = vdwg.mxu0
    %931 = vmatpush.bf16.msra.mxu0 0
    %932 = vmatpush.bf16.msra.mxu0 0
    %933 = vmatpush.bf16.msra.mxu0 0
    %934 = vmatpush.bf16.msra.mxu0 0
    %935 = vmatpush.bf16.msra.mxu0 0
    %936 = vmatpush.bf16.msra.mxu0 0
    %937 = vmatpush.bf16.msra.mxu0 %v452
    %938 = vmatpush.bf16.msra.mxu0 %v451
    %939 = vmatmul.bf16.gmra.mxu0 %v890
    %v940 = vpop.f32.mrf.mxu0
    %v941 = vadd.f32 0.0, %v940
    %v942 = vpop.f32.mrf.mxu0
    %943 = vdwg.mxu0
    %v944 = vpack.c.bf16 %v792, %v792
    %v945 = vpack.c.bf16 %v805, %v805
    %v946 = vpack.c.bf16 %v818, %v818
    %v947 = vpack.c.bf16 %v831, %v831
    %v948 = vpack.c.bf16 %v847, %v847
    %v949 = vpack.c.bf16 %v860, %v860
    %v950 = vpack.c.bf16 %v873, %v873
    %v951 = vpack.c.bf16 %v886, %v886
    %v953 = vsel %vm476, %v944, 0
    %v956 = vsel %vm476, %v948, 0
    %958 = vmatpush.bf16.xpose.msra.mxu0 0
    %959 = vmatpush.bf16.xpose.msra.mxu0 0
    %960 = vmatpush.bf16.xpose.msra.mxu0 0
    %961 = vmatpush.bf16.xpose.msra.mxu0 0
    %962 = vmatpush.bf16.xpose.msra.mxu0 0
    %963 = vmatpush.bf16.xpose.msra.mxu0 0
    %964 = vmatpush.bf16.xpose.msra.mxu0 0
    %965 = vmatpush.bf16.xpose.msra.mxu0 %v956
    %966 = vmatmul.bf16.gmra.mxu0 %v953
    %v967 = vpop.f32.mrf.mxu0
    %v968 = vadd.f32 0.0, %v967
    %v969 = vpop.f32.mrf.mxu0
    %970 = vdwg.mxu0
    %v972 = vsel %vm476, %v945, 0
    %v975 = vsel %vm476, %v949, 0
    %977 = vmatpush.bf16.xpose.msra.mxu0 0
    %978 = vmatpush.bf16.xpose.msra.mxu0 0
    %979 = vmatpush.bf16.xpose.msra.mxu0 0
    %980 = vmatpush.bf16.xpose.msra.mxu0 0
    %981 = vmatpush.bf16.xpose.msra.mxu0 0
    %982 = vmatpush.bf16.xpose.msra.mxu0 0
    %983 = vmatpush.bf16.xpose.msra.mxu0 0
    %984 = vmatpush.bf16.xpose.msra.mxu0 %v975
    %985 = vmatmul.bf16.gmra.mxu0 %v972
    %v986 = vpop.f32.mrf.mxu0
    %v987 = vadd.f32 0.0, %v986
    %v988 = vpop.f32.mrf.mxu0
    %989 = vdwg.mxu0
    %v991 = vsel %vm476, %v946, 0
    %v994 = vsel %vm476, %v950, 0
    %996 = vmatpush.bf16.xpose.msra.mxu0 0
    %997 = vmatpush.bf16.xpose.msra.mxu0 0
    %998 = vmatpush.bf16.xpose.msra.mxu0 0
    %999 = vmatpush.bf16.xpose.msra.mxu0 0
    %1000 = vmatpush.bf16.xpose.msra.mxu0 0
    %1001 = vmatpush.bf16.xpose.msra.mxu0 0
    %1002 = vmatpush.bf16.xpose.msra.mxu0 0
    %1003 = vmatpush.bf16.xpose.msra.mxu0 %v994
    %1004 = vmatmul.bf16.gmra.mxu0 %v991
    %v1005 = vpop.f32.mrf.mxu0
    %v1006 = vadd.f32 0.0, %v1005
    %v1007 = vpop.f32.mrf.mxu0
    %1008 = vdwg.mxu0
    %v1010 = vsel %vm476, %v947, 0
    %v1013 = vsel %vm476, %v951, 0
    %1015 = vmatpush.bf16.xpose.msra.mxu0 0
    %1016 = vmatpush.bf16.xpose.msra.mxu0 0
    %1017 = vmatpush.bf16.xpose.msra.mxu0 0
    %1018 = vmatpush.bf16.xpose.msra.mxu0 0
    %1019 = vmatpush.bf16.xpose.msra.mxu0 0
    %1020 = vmatpush.bf16.xpose.msra.mxu0 0
    %1021 = vmatpush.bf16.xpose.msra.mxu0 0
    %1022 = vmatpush.bf16.xpose.msra.mxu0 %v1013
    %1023 = vmatmul.bf16.gmra.mxu0 %v1010
    %v1024 = vpop.f32.mrf.mxu0
    %v1025 = vadd.f32 0.0, %v1024
    %v1026 = vpop.f32.mrf.mxu0
    %1027 = vdwg.mxu0
    %v1028 = vsel %vm476, %v968, -inf
    %1029 = vmax.xlane.f32.xlu0 %v1028
    %v1030 = vpop.xlane.xlu0 %1029
    %v1031 = vsel %vm476, %v987, -inf
    %1032 = vmax.xlane.f32.xlu0 %v1031
    %v1033 = vpop.xlane.xlu0 %1032
    %v1034 = vsel %vm476, %v1006, -inf
    %1035 = vmax.xlane.f32.xlu0 %v1034
    %v1036 = vpop.xlane.xlu0 %1035
    %v1037 = vsel %vm476, %v1025, -inf
    %1038 = vmax.xlane.f32.xlu0 %v1037
    %v1039 = vpop.xlane.xlu0 %1038
    %v1040 = vsub.f32 %v968, %v1030
    %v1041 = vsub.f32 %v987, %v1033
    %v1042 = vsub.f32 %v1006, %v1036
    %v1043 = vsub.f32 %v1025, %v1039
    %v1044 = vmul.f32 %v1040, 1.442695
    %v1045 = vpow.pop %v1044
    %v1046 = vmul.f32 %v1041, 1.442695
    %v1047 = vpow.pop %v1046
    %v1048 = vmul.f32 %v1042, 1.442695
    %v1049 = vpow.pop %v1048
    %v1050 = vmul.f32 %v1043, 1.442695
    %v1051 = vpow.pop %v1050
    %v1052 = vsel %vm476, %v1045, 0.0
    %1053 = vadd.xlane.f32.xlu0 %v1052
    %v1054 = vpop.xlane.xlu0 %1053
    %v1055 = vsel %vm476, %v1047, 0.0
    %1056 = vadd.xlane.f32.xlu0 %v1055
    %v1057 = vpop.xlane.xlu0 %1056
    %v1058 = vsel %vm476, %v1049, 0.0
    %1059 = vadd.xlane.f32.xlu0 %v1058
    %v1060 = vpop.xlane.xlu0 %1059
    %v1061 = vsel %vm476, %v1051, 0.0
    %1062 = vadd.xlane.f32.xlu0 %v1061
    %v1063 = vpop.xlane.xlu0 %1062
    %v1064 = vrcp.pop %v1054
    %v1065 = vrcp.pop %v1057
    %v1066 = vrcp.pop %v1060
    %v1067 = vrcp.pop %v1063
    %v1068 = vmul.f32 %v1045, %v1064
    %v1069 = vmul.f32 %v1047, %v1065
    %v1070 = vmul.f32 %v1049, %v1066
    %v1071 = vmul.f32 %v1051, %v1067
    %s1072 = scalar_lea.vmem [#allocation4], 32
    %1073 = vst.msk [vmem:[%s1072] sm:$0xff] %vm476, %v1068
    %1074 = vst.msk [vmem:[%s1072 + $0x8] sm:$0xff] %vm476, %v1069
    %1075 = vst.msk [vmem:[%s1072 + $0x10] sm:$0xff] %vm476, %v1070
    %1076 = vst.msk [vmem:[%s1072 + $0x18] sm:$0xff] %vm476, %v1071
    %v1077 = vpack.c.bf16 %v1068, %v1068
    %v1078 = vpack.c.bf16 %v1069, %v1069
    %v1079 = vpack.c.bf16 %v1070, %v1070
    %v1080 = vpack.c.bf16 %v1071, %v1071
    %v1081 = vpack.c.bf16 %v902, %v902
    %v1082 = vpack.c.bf16 %v915, %v915
    %v1083 = vpack.c.bf16 %v928, %v928
    %v1084 = vpack.c.bf16 %v941, %v941
    %v1086 = vsel %vm476, %v1077, 0
    %v1089 = vsel %vm612, %v1081, 0
    %1091 = vmatpush.bf16.msra.mxu0 0
    %1092 = vmatpush.bf16.msra.mxu0 0
    %1093 = vmatpush.bf16.msra.mxu0 0
    %1094 = vmatpush.bf16.msra.mxu0 0
    %1095 = vmatpush.bf16.msra.mxu0 0
    %1096 = vmatpush.bf16.msra.mxu0 0
    %1097 = vmatpush.bf16.msra.mxu0 0
    %1098 = vmatpush.bf16.msra.mxu0 %v1089
    %1099 = vmatmul.bf16.gmra.mxu0 %v1086
    %v1100 = vpop.f32.mrf.mxu0
    %v1101 = vadd.f32 0.0, %v1100
    %v1102 = vpop.f32.mrf.mxu0
    %1103 = vdwg.mxu0
    %v1105 = vsel %vm476, %v1078, 0
    %v1108 = vsel %vm612, %v1082, 0
    %1110 = vmatpush.bf16.msra.mxu0 0
    %1111 = vmatpush.bf16.msra.mxu0 0
    %1112 = vmatpush.bf16.msra.mxu0 0
    %1113 = vmatpush.bf16.msra.mxu0 0
    %1114 = vmatpush.bf16.msra.mxu0 0
    %1115 = vmatpush.bf16.msra.mxu0 0
    %1116 = vmatpush.bf16.msra.mxu0 0
    %1117 = vmatpush.bf16.msra.mxu0 %v1108
    %1118 = vmatmul.bf16.gmra.mxu0 %v1105
    %v1119 = vpop.f32.mrf.mxu0
    %v1120 = vadd.f32 0.0, %v1119
    %v1121 = vpop.f32.mrf.mxu0
    %1122 = vdwg.mxu0
    %v1124 = vsel %vm476, %v1079, 0
    %v1127 = vsel %vm612, %v1083, 0
    %1129 = vmatpush.bf16.msra.mxu0 0
    %1130 = vmatpush.bf16.msra.mxu0 0
    %1131 = vmatpush.bf16.msra.mxu0 0
    %1132 = vmatpush.bf16.msra.mxu0 0
    %1133 = vmatpush.bf16.msra.mxu0 0
    %1134 = vmatpush.bf16.msra.mxu0 0
    %1135 = vmatpush.bf16.msra.mxu0 0
    %1136 = vmatpush.bf16.msra.mxu0 %v1127
    %1137 = vmatmul.bf16.gmra.mxu0 %v1124
    %v1138 = vpop.f32.mrf.mxu0
    %v1139 = vadd.f32 0.0, %v1138
    %v1140 = vpop.f32.mrf.mxu0
    %1141 = vdwg.mxu0
    %v1143 = vsel %vm476, %v1080, 0
    %v1146 = vsel %vm612, %v1084, 0
    %1148 = vmatpush.bf16.msra.mxu0 0
    %1149 = vmatpush.bf16.msra.mxu0 0
    %1150 = vmatpush.bf16.msra.mxu0 0
    %1151 = vmatpush.bf16.msra.mxu0 0
    %1152 = vmatpush.bf16.msra.mxu0 0
    %1153 = vmatpush.bf16.msra.mxu0 0
    %1154 = vmatpush.bf16.msra.mxu0 0
    %1155 = vmatpush.bf16.msra.mxu0 %v1146
    %1156 = vmatmul.bf16.gmra.mxu0 %v1143
    %v1157 = vpop.f32.mrf.mxu0
    %v1158 = vadd.f32 0.0, %v1157
    %v1159 = vpop.f32.mrf.mxu0
    %1160 = vdwg.mxu0
    %v1161 = vpack.c.bf16 %v1101, %v1101
    %v1162 = vpack.c.bf16 %v1120, %v1120
    %v1163 = vpack.c.bf16 %v1139, %v1139
    %v1164 = vpack.c.bf16 %v1158, %v1158
    %v1166 = vsel %vm476, %v1161, 0
    %1168 = vmatpush.bf16.msra.mxu0 0
    %1169 = vmatpush.bf16.msra.mxu0 0
    %1170 = vmatpush.bf16.msra.mxu0 0
    %1171 = vmatpush.bf16.msra.mxu0 0
    %1172 = vmatpush.bf16.msra.mxu0 0
    %1173 = vmatpush.bf16.msra.mxu0 0
    %1174 = vmatpush.bf16.msra.mxu0 0
    %1175 = vmatpush.bf16.msra.mxu0 %v694
    %1176 = vmatmul.bf16.gmra.mxu0 %v1166
    %v1177 = vpop.f32.mrf.mxu0
    %v1178 = vadd.f32 0.0, %v1177
    %v1179 = vpop.f32.mrf.mxu0
    %1180 = vdwg.mxu0
    %v1182 = vsel %vm476, %v1162, 0
    %1184 = vmatpush.bf16.msra.mxu0 0
    %1185 = vmatpush.bf16.msra.mxu0 0
    %1186 = vmatpush.bf16.msra.mxu0 0
    %1187 = vmatpush.bf16.msra.mxu0 0
    %1188 = vmatpush.bf16.msra.mxu0 0
    %1189 = vmatpush.bf16.msra.mxu0 0
    %1190 = vmatpush.bf16.msra.mxu0 0
    %1191 = vmatpush.bf16.msra.mxu0 %v713
    %1192 = vmatmul.bf16.gmra.mxu0 %v1182
    %v1193 = vpop.f32.mrf.mxu0
    %v1194 = vadd.f32 0.0, %v1193
    %v1195 = vpop.f32.mrf.mxu0
    %1196 = vdwg.mxu0
    %v1198 = vsel %vm476, %v1163, 0
    %1200 = vmatpush.bf16.msra.mxu0 0
    %1201 = vmatpush.bf16.msra.mxu0 0
    %1202 = vmatpush.bf16.msra.mxu0 0
    %1203 = vmatpush.bf16.msra.mxu0 0
    %1204 = vmatpush.bf16.msra.mxu0 0
    %1205 = vmatpush.bf16.msra.mxu0 0
    %1206 = vmatpush.bf16.msra.mxu0 0
    %1207 = vmatpush.bf16.msra.mxu0 %v732
    %1208 = vmatmul.bf16.gmra.mxu0 %v1198
    %v1209 = vpop.f32.mrf.mxu0
    %v1210 = vadd.f32 0.0, %v1209
    %v1211 = vpop.f32.mrf.mxu0
    %1212 = vdwg.mxu0
    %v1214 = vsel %vm476, %v1164, 0
    %1216 = vmatpush.bf16.msra.mxu0 0
    %1217 = vmatpush.bf16.msra.mxu0 0
    %1218 = vmatpush.bf16.msra.mxu0 0
    %1219 = vmatpush.bf16.msra.mxu0 0
    %1220 = vmatpush.bf16.msra.mxu0 0
    %1221 = vmatpush.bf16.msra.mxu0 0
    %1222 = vmatpush.bf16.msra.mxu0 0
    %1223 = vmatpush.bf16.msra.mxu0 %v751
    %1224 = vmatmul.bf16.gmra.mxu0 %v1214
    %v1225 = vpop.f32.mrf.mxu0
    %v1226 = vadd.f32 0.0, %v1225
    %v1227 = vpop.f32.mrf.mxu0
    %1228 = vdwg.mxu0
    %v1229 = vsel %vm39, %v1178, 0.0
    %v1230 = vsel %vm39, %v1194, 0.0
    %v1231 = vadd.f32 %v1229, %v1230
    %v1232 = vsel %vm39, %v1210, 0.0
    %v1233 = vadd.f32 %v1231, %v1232
    %v1234 = vsel %vm39, %v1226, 0.0
    %v1235 = vadd.f32 %v1233, %v1234
    %v1236 = vadd.f32 %v1235, %v38
    %s1237 = scalar_lea.vmem [#allocation2], 8
    %1238 = vst.msk [vmem:[%s1237] sm:$0xff] %vm39, %v1236
    // Predicated region
    $region38: #{tpu_custom_call.1} parent=1 // pred_check
      _
    $region39: #{tpu_custom_call.1} parent=1 // pred_check_branch
      %1240 = sbr.rel (0) target = $region41
    $region40: #{tpu_custom_call.1} parent=1 // pred_region
      %1242 = vsyncadd [#allocation3], 0
      %s1243 = sshll.u32 [#allocation2], 4
      %s1244 = int_to_ptr.vmem [resolvable:$true] %s1243
      %s1245 = sshll.u32 %s9, 4
      %s1246 = int_to_ptr.hbm [resolvable:$true] %s1245
      %1251 = dma.vmem_to_hbm [thread:$0]  %s1244, 256, %s1246, [#allocation3], 128, 128, 8
    $region41: #{tpu_custom_call.1} parent=1 // pred_fallthru
      _
    // Predicated region
    $region42: #{tpu_custom_call.1} parent=1 // pred_check
      _
    $region43: #{tpu_custom_call.1} parent=1 // pred_check_branch
      %1253 = sbr.rel (0) target = $region45
    $region44: #{tpu_custom_call.1} parent=1 // pred_region
      %1255 = vsyncadd [#allocation5], 0
      %s1256 = sshll.u32 [#allocation4], 4
      %s1257 = int_to_ptr.vmem [resolvable:$true] %s1256
      %s1258 = sshll.u32 %s10, 4
      %s1259 = int_to_ptr.hbm [resolvable:$true] %s1258
      %1264 = dma.vmem_to_hbm [thread:$0]  %s1257, 1024, %s1259, [#allocation5], 128, 128, 8
    $region45: #{tpu_custom_call.1} parent=1 // pred_fallthru
      _
    // Predicated region
    $region46: #{tpu_custom_call.1} parent=1 // pred_check
      _
    $region47: #{tpu_custom_call.1} parent=1 // pred_check_branch
      %1266 = sbr.rel (0) target = $region49
    $region48: #{tpu_custom_call.1} parent=1 // pred_region
      %1268 = dma.done [#allocation3], 256
    $region49: #{tpu_custom_call.1} parent=1 // pred_fallthru
      _
    // Predicated region
    $region50: #{tpu_custom_call.1} parent=1 // pred_check
      _
    $region51: #{tpu_custom_call.1} parent=1 // pred_check_branch
      %1270 = sbr.rel (0) target = $region53
    $region52: #{tpu_custom_call.1} parent=1 // pred_region
      %1272 = dma.done [#allocation5], 1024
    $region53: #{tpu_custom_call.1} parent=1 // pred_fallthru
      _
    %1273 = vsyncpa [#allocation3], 1
    %1274 = vsyncpa [#allocation5], 1

</llo_original>
